<compile_context>
chip_gen: v7x
topology: tpu7x:2x2x1
jax: 0.10.0
libtpu: 0.0.40
codegen_flags: <defaults>
</compile_context>

<pallas_src>
import math
import functools

import jax
import jax.numpy as jnp
from jax import lax
from jax.experimental import pallas as pl
from jax.experimental.pallas import tpu as pltpu

_INV_SQRT2 = 1.0 / math.sqrt(2.0)
_SQRT_2_OVER_PI = math.sqrt(2.0 / math.pi)


def _round_up(x, m):
    return ((x + m - 1) // m) * m


def _tpu_vmem_and_cores():
    """Per-TensorCore VMEM capacity + a cores-per-chip heuristic (64 MiB VMEM => v7x, 2 TCs)."""
    vmem = 64 << 20
    try:
        info = pltpu.get_tpu_info()
        vmem = int(getattr(info, "vmem_capacity_bytes", vmem))
    except Exception:
        pass
    cores = 2 if vmem <= (64 << 20) else 1
    return vmem, cores


def _prediction_kernel(x_ref, w1_ref, lnp_ref, w2_ref, b2_ref, o_ref, *,
                       inv_hidden, compute_dtype, approximate_gelu):
    """Fused: (x @ W1 + b1) -> GELU -> LayerNorm(fp32, eps=1e-6) -> (@ W2 + b2).

    Matmuls run in `compute_dtype` (bf16 by default) with f32 MXU accumulation; the
    elementwise epilogue (GELU + LayerNorm) runs in f32.
    """
    p = lnp_ref[...]                       # (3, H_pad) f32: rows = b1, gamma, beta
    b1 = p[0:1, :]
    gamma = p[1:2, :]
    beta = p[2:3, :]

    # ---- Linear 1 (MXU, f32 accumulation) ----
    h = jnp.dot(x_ref[...], w1_ref[...], preferred_element_type=jnp.float32) + b1

    # ---- GELU ----
    if approximate_gelu:
        # tanh approximation: transcendental issues on the EUP slot instead of a VALU polynomial
        g = 0.5 * h * (1.0 + jnp.tanh(jnp.float32(_SQRT_2_OVER_PI)
                                      * (h + jnp.float32(0.044715) * h * h * h)))
    else:
        # exact (erf-based) GELU, matching torch.nn.GELU() default
        g = 0.5 * h * (1.0 + lax.erf(h * jnp.float32(_INV_SQRT2)))

    # ---- LayerNorm over the *real* hidden size, single pass.
    #      Padded lanes of g are exactly 0 (padded W1 cols / b1 lanes are 0, GELU(0)=0),
    #      so they contribute nothing to either sum: no mask needed. ----
    inv_h = jnp.float32(inv_hidden)
    mean = jnp.sum(g, axis=-1, keepdims=True) * inv_h
    ex2 = jnp.sum(g * g, axis=-1, keepdims=True) * inv_h
    var = jnp.maximum(ex2 - mean * mean, jnp.float32(0.0))
    inv = lax.rsqrt(var + jnp.float32(1e-6))
    # fold gamma into the per-row scale; padded lanes of gamma/beta are 0 so ln stays 0 there
    ln = (g - mean) * (inv * gamma) + beta

    # ---- Linear 2 (MXU, f32 accumulation) ----
    out = jnp.dot(ln.astype(compute_dtype), w2_ref[...],
                  preferred_element_type=jnp.float32) + b2_ref[...]

    o_ref[...] = out.astype(o_ref.dtype)


def prepare_prediction_params(params, *, compute_dtype=jnp.bfloat16):
    """Pre-pad / pre-cast parameters ONCE (hoists per-call padding/casting off the forward path).

    Feature axes are padded to multiples of 128 (lane-dense blocks); b1/gamma/beta are packed
    into a single (3, H_pad) f32 block.
    """
    w1, b1 = params["w1"], params["b1"]
    gamma, beta = params["gamma"], params["beta"]
    w2, b2 = params["w2"], params["b2"]
    K, H = w1.shape
    O = w2.shape[1]
    K_pad, H_pad, O_pad = _round_up(K, 128), _round_up(H, 128), _round_up(O, 128)

    compute_dtype = jnp.dtype(compute_dtype)
    w1_p = jnp.pad(w1.astype(compute_dtype), ((0, K_pad - K), (0, H_pad - H)))
    w2_p = jnp.pad(w2.astype(compute_dtype), ((0, H_pad - H), (0, O_pad - O)))
    lnp = jnp.pad(jnp.stack([b1, gamma, beta]).astype(jnp.float32),
                  ((0, 0), (0, H_pad - H)))                     # (3, H_pad)
    b2_p = jnp.pad(b2.astype(jnp.float32).reshape(1, O), ((0, 0), (0, O_pad - O)))

    return {"_prepared": True, "K": K, "H": H, "O": O, "compute_dtype": compute_dtype,
            "w1": w1_p, "lnp": lnp, "w2": w2_p, "b2": b2_p}


def prediction_forward(a, params, b=None, *, tile_m=512, compute_dtype=jnp.bfloat16,
                       out_dtype=None, approximate_gelu=False, min_grid_m=None):
    """JAX wrapper around the fused Pallas kernel.

    a:      [..., inp_features]   (leading dims flattened internally)
    b:      optional tensor concatenated on the last axis (torch.cat([a, b], dim=-1) path)
    params: raw dict {w1, b1, gamma, beta, w2, b2} or the output of prepare_prediction_params.
    """
    if b is not None:                      # glue: optional concat path
        a = jnp.concatenate([a, b], axis=-1)

    if not (isinstance(params, dict) and params.get("_prepared", False)):
        params = prepare_prediction_params(params, compute_dtype=compute_dtype)
    compute_dtype = params["compute_dtype"]

    K, H, O = params["K"], params["H"], params["O"]
    K_pad, H_pad = params["w1"].shape
    O_pad = params["w2"].shape[1]

    orig_dtype = a.dtype
    out_dtype = jnp.dtype(orig_dtype if out_dtype is None else out_dtype)
    lead_shape = a.shape[:-1]
    assert a.shape[-1] == K, f"expected last dim {K}, got {a.shape[-1]}"
    a2 = a.reshape(-1, K)
    M = a2.shape[0]

    vmem_cap, n_cores = _tpu_vmem_and_cores()
    if min_grid_m is None:
        min_grid_m = n_cores               # 2 on v7x so both TensorCores get work, 1 on v5e/v6e

    # ---- batch tiling: big tile, capped to the (padded) batch, multiple of 8,
    #      and at least `min_grid_m` grid steps whenever the batch allows it ----
    M8 = _round_up(max(M, 1), 8)
    tile_m = max(8, min(_round_up(tile_m, 8), M8))
    if min_grid_m > 1 and M8 >= 8 * min_grid_m and pl.cdiv(M8, tile_m) < min_grid_m:
        tile_m = max(8, _round_up(pl.cdiv(M8, min_grid_m), 8))
    grid_m = pl.cdiv(M, tile_m)
    M_pad = grid_m * tile_m

    # ---- activations: cast/pad only when actually needed ----
    x = a2 if a2.dtype == compute_dtype else a2.astype(compute_dtype)
    if M_pad != M or K_pad != K:
        x = jnp.pad(x, ((0, M_pad - M), (0, K_pad - K)))

    kernel = functools.partial(
        _prediction_kernel,
        inv_hidden=1.0 / float(H),
        compute_dtype=compute_dtype,
        approximate_gelu=approximate_gelu)

    cbytes = jnp.dtype(compute_dtype).itemsize
    obytes = out_dtype.itemsize

    def _run(single_buffer_weights):
        # grid-invariant operands fetched once -> single VMEM buffer if supported
        kw = {"pipeline_mode": pl.Buffered(1)} if single_buffer_weights else {}
        wbuf = 1 if single_buffer_weights else 2

        est = (2 * tile_m * K_pad * cbytes                     # x tile, double-buffered
               + 2 * tile_m * O_pad * obytes                   # out tile, double-buffered
               + wbuf * (K_pad * H_pad + H_pad * O_pad) * cbytes   # resident weights
               + wbuf * (3 * H_pad + O_pad) * 4                # packed LN params + b2
               + 3 * tile_m * H_pad * 4)                       # f32 epilogue intermediates
        vmem_limit = int(min(max(est * 14 // 10 + (4 << 20), 32 << 20),
                             vmem_cap * 85 // 100))

        return pl.pallas_call(
            kernel,
            out_shape=jax.ShapeDtypeStruct((M_pad, O_pad), out_dtype),
            grid_spec=pltpu.PrefetchScalarGridSpec(
                num_scalar_prefetch=0,
                grid=(grid_m,),
                in_specs=[
                    pl.BlockSpec((tile_m, K_pad), lambda i: (i, 0)),        # x tile
                    pl.BlockSpec((K_pad, H_pad), lambda i: (0, 0), **kw),   # W1 (resident)
                    pl.BlockSpec((3, H_pad), lambda i: (0, 0), **kw),       # b1 / gamma / beta
                    pl.BlockSpec((H_pad, O_pad), lambda i: (0, 0), **kw),   # W2 (resident)
                    pl.BlockSpec((1, O_pad), lambda i: (0, 0), **kw),       # b2
                ],
                out_specs=pl.BlockSpec((tile_m, O_pad), lambda i: (i, 0)),
            ),
            compiler_params=pltpu.CompilerParams(
                dimension_semantics=("parallel",),
                vmem_limit_bytes=vmem_limit),
        )(x, params["w1"], params["lnp"], params["w2"], params["b2"])

    try:
        out = _run(hasattr(pl, "Buffered"))
    except Exception:
        out = _run(False)                  # fallback: default double-buffered operands

    return out[:M, :O].reshape(*lead_shape, O)


def init_prediction_params(key, inp_features, out_features, hidden_size):
    """Deterministic parameter init mirroring the PyTorch module's __init__."""
    k1, k2, k3 = jax.random.split(key, 3)
    # inner Linear: weight ~ N(0, sqrt(2/in)), bias = 0
    w1 = (jax.random.normal(k1, (inp_features, hidden_size), jnp.float32)
          * math.sqrt(2.0 / inp_features))
    b1 = jnp.zeros((hidden_size,), jnp.float32)
    # LayerNorm affine: ones / zeros
    gamma = jnp.ones((hidden_size,), jnp.float32)
    beta = jnp.zeros((hidden_size,), jnp.float32)
    # outer nn.Linear: default torch init = U(-1/sqrt(fan_in), 1/sqrt(fan_in))
    bound = 1.0 / math.sqrt(hidden_size)
    w2 = jax.random.uniform(k2, (hidden_size, out_features), jnp.float32,
                            minval=-bound, maxval=bound)
    b2 = jax.random.uniform(k3, (out_features,), jnp.float32,
                            minval=-bound, maxval=bound)
    return {"w1": w1, "b1": b1, "gamma": gamma, "beta": beta, "w2": w2, "b2": b2}


def _reference_forward(a, params):
    """Pure-JAX f32 reference for a sanity check."""
    h = a.astype(jnp.float32) @ params["w1"] + params["b1"]
    g = 0.5 * h * (1.0 + lax.erf(h / jnp.sqrt(2.0)))
    mean = jnp.mean(g, axis=-1, keepdims=True)
    var = jnp.mean((g - mean) ** 2, axis=-1, keepdims=True)
    ln = (g - mean) / jnp.sqrt(var + 1e-6) * params["gamma"] + params["beta"]
    return (ln @ params["w2"] + params["b2"]).astype(a.dtype)


if __name__ == "__main__":
    # Small shapes consistent with the module: Prediction(inp_features=48, out_features=24,
    # hidden_size=256). Unaligned K/O exercise the lane-padding path; batch=32 exercises the
    # adaptive tile_m cap and the grid_m >= num_cores split.
    batch, inp_features, hidden_size, out_features = 32, 48, 256, 24

    key = jax.random.PRNGKey(0)
    k_x, k_p = jax.random.split(key)
    x = jax.random.normal(k_x, (batch, inp_features), jnp.float32)
    params = init_prediction_params(k_p, inp_features, out_features, hidden_size)

    ref = _reference_forward(x, params)

    # bf16 MXU path (default) with pre-padded params — loose tolerance vs the f32 reference
    prepared_bf16 = prepare_prediction_params(params, compute_dtype=jnp.bfloat16)
    out_bf16 = jax.block_until_ready(prediction_forward(x, prepared_bf16))
    assert out_bf16.shape == (batch, out_features)
    assert float(jnp.max(jnp.abs(out_bf16 - ref))) < 5e-2, "bf16 kernel mismatch vs reference"

    # f32 compute path — tight tolerance
    prepared_f32 = prepare_prediction_params(params, compute_dtype=jnp.float32)
    out_f32 = jax.block_until_ready(prediction_forward(x, prepared_f32))
    assert jnp.allclose(out_f32, ref, atol=2e-4, rtol=2e-4), "f32 kernel mismatch vs reference"

    # fast tanh-GELU path (EUP) — looser tolerance (approximation differs from exact erf)
    out_fast = jax.block_until_ready(
        prediction_forward(x, prepared_bf16, approximate_gelu=True))
    assert out_fast.shape == (batch, out_features)
    assert float(jnp.max(jnp.abs(out_fast - ref))) < 2e-1, "approx-GELU kernel diverged"

    # raw (unprepared) params still accepted — padding happens on the fly
    out_raw = jax.block_until_ready(prediction_forward(x, params))
    assert float(jnp.max(jnp.abs(out_raw - out_bf16))) < 1e-6

    print("KERNEL_OK")
</pallas_src>

<mosaic_0001>
module attributes {stable_mosaic.version = 11 : i64} {
  func.func @_prediction_kernel(%arg0: i32, %arg1: memref<16x128xbf16, #tpu.memory_space<vmem>>, %arg2: memref<128x256xbf16, #tpu.memory_space<vmem>>, %arg3: memref<3x256xf32, #tpu.memory_space<vmem>>, %arg4: memref<256x128xbf16, #tpu.memory_space<vmem>>, %arg5: memref<1x128xf32, #tpu.memory_space<vmem>>, %arg6: memref<16x128xf32, #tpu.memory_space<vmem>>) attributes {dimension_semantics = [#tpu.dimension_semantics<parallel>], iteration_bounds = array<i64: 2>, scalar_prefetch = 0 : i64, scratch_operands = 0 : i64, tpu.core_type = #tpu.core_type<tc>, window_params = [{transform_indices = @transform_0, window_bounds = array<i64: 16, 128>}, {pipeline_mode = #tpu.pipeline_mode<synchronous>, transform_indices = @transform_1, window_bounds = array<i64: 128, 256>}, {pipeline_mode = #tpu.pipeline_mode<synchronous>, transform_indices = @transform_2, window_bounds = array<i64: 3, 256>}, {pipeline_mode = #tpu.pipeline_mode<synchronous>, transform_indices = @transform_3, window_bounds = array<i64: 256, 128>}, {pipeline_mode = #tpu.pipeline_mode<synchronous>, transform_indices = @transform_4, window_bounds = array<i64: 1, 128>}, {transform_indices = @transform_5, window_bounds = array<i64: 16, 128>}]} {
    %c0 = arith.constant 0 : index
    %c0_0 = arith.constant 0 : index
    %0 = vector.load %arg3[%c0, %c0_0] : memref<3x256xf32, #tpu.memory_space<vmem>>, vector<3x256xf32>
    %1 = vector.extract_strided_slice %0 {offsets = [0, 0], sizes = [1, 256], strides = [1, 1]} : vector<3x256xf32> to vector<1x256xf32>
    %2 = vector.extract_strided_slice %0 {offsets = [1, 0], sizes = [1, 256], strides = [1, 1]} : vector<3x256xf32> to vector<1x256xf32>
    %3 = vector.extract_strided_slice %0 {offsets = [2, 0], sizes = [1, 256], strides = [1, 1]} : vector<3x256xf32> to vector<1x256xf32>
    %c0_1 = arith.constant 0 : index
    %c0_2 = arith.constant 0 : index
    %4 = vector.load %arg1[%c0_1, %c0_2] : memref<16x128xbf16, #tpu.memory_space<vmem>>, vector<16x128xbf16>
    %c0_3 = arith.constant 0 : index
    %c0_4 = arith.constant 0 : index
    %5 = vector.load %arg2[%c0_3, %c0_4] : memref<128x256xbf16, #tpu.memory_space<vmem>>, vector<128x256xbf16>
    %cst = arith.constant dense<0.000000e+00> : vector<16x256xf32>
    %6 = tpu.matmul %4, %5, %cst {dimension_numbers = #tpu.dot_dimension_numbers<[1], [0], [0], [1], [0, 0, 1, 1], [], []>} : vector<16x128xbf16>, vector<128x256xbf16>, vector<16x256xf32> -> vector<16x256xf32>
    %7 = vector.broadcast %1 : vector<1x256xf32> to vector<16x256xf32>
    %8 = arith.addf %6, %7 : vector<16x256xf32>
    %cst_5 = arith.constant 5.000000e-01 : f32
    %9 = vector.broadcast %cst_5 : f32 to vector<16x256xf32>
    %10 = arith.mulf %9, %8 : vector<16x256xf32>
    %cst_6 = arith.constant 0.707106769 : f32
    %11 = vector.broadcast %cst_6 : f32 to vector<16x256xf32>
    %12 = arith.mulf %8, %11 : vector<16x256xf32>
    %13 = math.erf %12 : vector<16x256xf32>
    %cst_7 = arith.constant 1.000000e+00 : f32
    %14 = vector.broadcast %cst_7 : f32 to vector<16x256xf32>
    %15 = arith.addf %14, %13 : vector<16x256xf32>
    %16 = arith.mulf %10, %15 : vector<16x256xf32>
    %cst_8 = arith.constant dense<0.000000e+00> : vector<16xf32>
    %17 = vector.multi_reduction <add>, %16, %cst_8 [1] : vector<16x256xf32> to vector<16xf32>
    %18 = vector.shape_cast %17 : vector<16xf32> to vector<16x1xf32>
    %cst_9 = arith.constant 3.906250e-03 : f32
    %19 = vector.broadcast %cst_9 : f32 to vector<16x1xf32>
    %20 = arith.mulf %18, %19 : vector<16x1xf32>
    %21 = arith.mulf %16, %16 : vector<16x256xf32>
    %cst_10 = arith.constant dense<0.000000e+00> : vector<16xf32>
    %22 = vector.multi_reduction <add>, %21, %cst_10 [1] : vector<16x256xf32> to vector<16xf32>
    %23 = vector.shape_cast %22 : vector<16xf32> to vector<16x1xf32>
    %cst_11 = arith.constant 3.906250e-03 : f32
    %24 = vector.broadcast %cst_11 : f32 to vector<16x1xf32>
    %25 = arith.mulf %23, %24 : vector<16x1xf32>
    %26 = arith.mulf %20, %20 : vector<16x1xf32>
    %27 = arith.subf %25, %26 : vector<16x1xf32>
    %cst_12 = arith.constant 0.000000e+00 : f32
    %28 = vector.broadcast %cst_12 : f32 to vector<16x1xf32>
    %29 = arith.maximumf %27, %28 : vector<16x1xf32>
    %cst_13 = arith.constant 9.99999997E-7 : f32
    %30 = vector.broadcast %cst_13 : f32 to vector<16x1xf32>
    %31 = arith.addf %29, %30 : vector<16x1xf32>
    %32 = math.rsqrt %31 : vector<16x1xf32>
    %33 = vector.broadcast %20 : vector<16x1xf32> to vector<16x256xf32>
    %34 = arith.subf %16, %33 : vector<16x256xf32>
    %35 = vector.broadcast %32 : vector<16x1xf32> to vector<16x256xf32>
    %36 = vector.broadcast %2 : vector<1x256xf32> to vector<16x256xf32>
    %37 = arith.mulf %35, %36 : vector<16x256xf32>
    %38 = arith.mulf %34, %37 : vector<16x256xf32>
    %39 = vector.broadcast %3 : vector<1x256xf32> to vector<16x256xf32>
    %40 = arith.addf %38, %39 : vector<16x256xf32>
    %41 = arith.truncf %40 : vector<16x256xf32> to vector<16x256xbf16>
    %c0_14 = arith.constant 0 : index
    %c0_15 = arith.constant 0 : index
    %42 = vector.load %arg4[%c0_14, %c0_15] : memref<256x128xbf16, #tpu.memory_space<vmem>>, vector<256x128xbf16>
    %cst_16 = arith.constant dense<0.000000e+00> : vector<16x128xf32>
    %43 = tpu.matmul %41, %42, %cst_16 {dimension_numbers = #tpu.dot_dimension_numbers<[1], [0], [0], [1], [0, 0, 1, 1], [], []>} : vector<16x256xbf16>, vector<256x128xbf16>, vector<16x128xf32> -> vector<16x128xf32>
    %c0_17 = arith.constant 0 : index
    %c0_18 = arith.constant 0 : index
    %44 = vector.load %arg5[%c0_17, %c0_18] : memref<1x128xf32, #tpu.memory_space<vmem>>, vector<1x128xf32>
    %45 = vector.broadcast %44 : vector<1x128xf32> to vector<16x128xf32>
    %46 = arith.addf %43, %45 : vector<16x128xf32>
    %c0_19 = arith.constant 0 : index
    %c0_20 = arith.constant 0 : index
    %47 = vector.load %arg6[%c0_19, %c0_20] : memref<16x128xf32, #tpu.memory_space<vmem>>, vector<16x128xf32>
    tpu.vector_store %arg6[%c0_19, %c0_20], %46 {strides = array<i32>} : memref<16x128xf32, #tpu.memory_space<vmem>>, vector<16x128xf32>,
    return
  }
  func.func @transform_0(%arg0: i32) -> (i32, i32) {
    %c0_i32 = arith.constant 0 : i32
    %c0_i32_0 = arith.constant 0 : i32
    return %arg0, %c0_i32 : i32, i32
  }
  func.func @transform_1(%arg0: i32) -> (i32, i32) {
    %c0_i32 = arith.constant 0 : i32
    %c0_i32_0 = arith.constant 0 : i32
    %c0_i32_1 = arith.constant 0 : i32
    return %c0_i32, %c0_i32_0 : i32, i32
  }
  func.func @transform_2(%arg0: i32) -> (i32, i32) {
    %c0_i32 = arith.constant 0 : i32
    %c0_i32_0 = arith.constant 0 : i32
    %c0_i32_1 = arith.constant 0 : i32
    return %c0_i32, %c0_i32_0 : i32, i32
  }
  func.func @transform_3(%arg0: i32) -> (i32, i32) {
    %c0_i32 = arith.constant 0 : i32
    %c0_i32_0 = arith.constant 0 : i32
    %c0_i32_1 = arith.constant 0 : i32
    return %c0_i32, %c0_i32_0 : i32, i32
  }
  func.func @transform_4(%arg0: i32) -> (i32, i32) {
    %c0_i32 = arith.constant 0 : i32
    %c0_i32_0 = arith.constant 0 : i32
    %c0_i32_1 = arith.constant 0 : i32
    return %c0_i32, %c0_i32_0 : i32, i32
  }
  func.func @transform_5(%arg0: i32) -> (i32, i32) {
    %c0_i32 = arith.constant 0 : i32
    %c0_i32_0 = arith.constant 0 : i32
    return %arg0, %c0_i32 : i32, i32
  }
}

module attributes {stable_mosaic.version = 11 : i64} {
  func.func @_prediction_kernel(%arg0: i32, %arg1: memref<16x128xbf16, #tpu.memory_space<vmem>>, %arg2: memref<128x256xbf16, #tpu.memory_space<vmem>>, %arg3: memref<3x256xf32, #tpu.memory_space<vmem>>, %arg4: memref<256x128xbf16, #tpu.memory_space<vmem>>, %arg5: memref<1x128xf32, #tpu.memory_space<vmem>>, %arg6: memref<16x128xf32, #tpu.memory_space<vmem>>) attributes {dimension_semantics = [#tpu.dimension_semantics<parallel>], iteration_bounds = array<i64: 2>, scalar_prefetch = 0 : i64, scratch_operands = 0 : i64, tpu.core_type = #tpu.core_type<tc>, window_params = [{transform_indices = @transform_0, window_bounds = array<i64: 16, 128>}, {pipeline_mode = #tpu.pipeline_mode<synchronous>, transform_indices = @transform_1, window_bounds = array<i64: 128, 256>}, {pipeline_mode = #tpu.pipeline_mode<synchronous>, transform_indices = @transform_2, window_bounds = array<i64: 3, 256>}, {pipeline_mode = #tpu.pipeline_mode<synchronous>, transform_indices = @transform_3, window_bounds = array<i64: 256, 128>}, {pipeline_mode = #tpu.pipeline_mode<synchronous>, transform_indices = @transform_4, window_bounds = array<i64: 1, 128>}, {transform_indices = @transform_5, window_bounds = array<i64: 16, 128>}]} {
    %c0 = arith.constant 0 : index
    %c0_0 = arith.constant 0 : index
    %0 = vector.load %arg3[%c0, %c0_0] : memref<3x256xf32, #tpu.memory_space<vmem>>, vector<3x256xf32>
    %1 = vector.extract_strided_slice %0 {offsets = [0, 0], sizes = [1, 256], strides = [1, 1]} : vector<3x256xf32> to vector<1x256xf32>
    %2 = vector.extract_strided_slice %0 {offsets = [1, 0], sizes = [1, 256], strides = [1, 1]} : vector<3x256xf32> to vector<1x256xf32>
    %3 = vector.extract_strided_slice %0 {offsets = [2, 0], sizes = [1, 256], strides = [1, 1]} : vector<3x256xf32> to vector<1x256xf32>
    %c0_1 = arith.constant 0 : index
    %c0_2 = arith.constant 0 : index
    %4 = vector.load %arg1[%c0_1, %c0_2] : memref<16x128xbf16, #tpu.memory_space<vmem>>, vector<16x128xbf16>
    %c0_3 = arith.constant 0 : index
    %c0_4 = arith.constant 0 : index
    %5 = vector.load %arg2[%c0_3, %c0_4] : memref<128x256xbf16, #tpu.memory_space<vmem>>, vector<128x256xbf16>
    %cst = arith.constant dense<0.000000e+00> : vector<16x256xf32>
    %6 = tpu.matmul %4, %5, %cst {dimension_numbers = #tpu.dot_dimension_numbers<[1], [0], [0], [1], [0, 0, 1, 1], [], []>} : vector<16x128xbf16>, vector<128x256xbf16>, vector<16x256xf32> -> vector<16x256xf32>
    %7 = vector.broadcast %1 : vector<1x256xf32> to vector<16x256xf32>
    %8 = arith.addf %6, %7 : vector<16x256xf32>
    %cst_5 = arith.constant 5.000000e-01 : f32
    %9 = vector.broadcast %cst_5 : f32 to vector<16x256xf32>
    %10 = arith.mulf %9, %8 : vector<16x256xf32>
    %cst_6 = arith.constant 0.707106769 : f32
    %11 = vector.broadcast %cst_6 : f32 to vector<16x256xf32>
    %12 = arith.mulf %8, %11 : vector<16x256xf32>
    %13 = math.erf %12 : vector<16x256xf32>
    %cst_7 = arith.constant 1.000000e+00 : f32
    %14 = vector.broadcast %cst_7 : f32 to vector<16x256xf32>
    %15 = arith.addf %14, %13 : vector<16x256xf32>
    %16 = arith.mulf %10, %15 : vector<16x256xf32>
    %cst_8 = arith.constant dense<0.000000e+00> : vector<16xf32>
    %17 = vector.multi_reduction <add>, %16, %cst_8 [1] : vector<16x256xf32> to vector<16xf32>
    %18 = vector.shape_cast %17 : vector<16xf32> to vector<16x1xf32>
    %cst_9 = arith.constant 3.906250e-03 : f32
    %19 = vector.broadcast %cst_9 : f32 to vector<16x1xf32>
    %20 = arith.mulf %18, %19 : vector<16x1xf32>
    %21 = arith.mulf %16, %16 : vector<16x256xf32>
    %cst_10 = arith.constant dense<0.000000e+00> : vector<16xf32>
    %22 = vector.multi_reduction <add>, %21, %cst_10 [1] : vector<16x256xf32> to vector<16xf32>
    %23 = vector.shape_cast %22 : vector<16xf32> to vector<16x1xf32>
    %cst_11 = arith.constant 3.906250e-03 : f32
    %24 = vector.broadcast %cst_11 : f32 to vector<16x1xf32>
    %25 = arith.mulf %23, %24 : vector<16x1xf32>
    %26 = arith.mulf %20, %20 : vector<16x1xf32>
    %27 = arith.subf %25, %26 : vector<16x1xf32>
    %cst_12 = arith.constant 0.000000e+00 : f32
    %28 = vector.broadcast %cst_12 : f32 to vector<16x1xf32>
    %29 = arith.maximumf %27, %28 : vector<16x1xf32>
    %cst_13 = arith.constant 9.99999997E-7 : f32
    %30 = vector.broadcast %cst_13 : f32 to vector<16x1xf32>
    %31 = arith.addf %29, %30 : vector<16x1xf32>
    %32 = math.rsqrt %31 : vector<16x1xf32>
    %33 = vector.broadcast %20 : vector<16x1xf32> to vector<16x256xf32>
    %34 = arith.subf %16, %33 : vector<16x256xf32>
    %35 = vector.broadcast %32 : vector<16x1xf32> to vector<16x256xf32>
    %36 = vector.broadcast %2 : vector<1x256xf32> to vector<16x256xf32>
    %37 = arith.mulf %35, %36 : vector<16x256xf32>
    %38 = arith.mulf %34, %37 : vector<16x256xf32>
    %39 = vector.broadcast %3 : vector<1x256xf32> to vector<16x256xf32>
    %40 = arith.addf %38, %39 : vector<16x256xf32>
    %41 = arith.truncf %40 : vector<16x256xf32> to vector<16x256xbf16>
    %c0_14 = arith.constant 0 : index
    %c0_15 = arith.constant 0 : index
    %42 = vector.load %arg4[%c0_14, %c0_15] : memref<256x128xbf16, #tpu.memory_space<vmem>>, vector<256x128xbf16>
    %cst_16 = arith.constant dense<0.000000e+00> : vector<16x128xf32>
    %43 = tpu.matmul %41, %42, %cst_16 {dimension_numbers = #tpu.dot_dimension_numbers<[1], [0], [0], [1], [0, 0, 1, 1], [], []>} : vector<16x256xbf16>, vector<256x128xbf16>, vector<16x128xf32> -> vector<16x128xf32>
    %c0_17 = arith.constant 0 : index
    %c0_18 = arith.constant 0 : index
    %44 = vector.load %arg5[%c0_17, %c0_18] : memref<1x128xf32, #tpu.memory_space<vmem>>, vector<1x128xf32>
    %45 = vector.broadcast %44 : vector<1x128xf32> to vector<16x128xf32>
    %46 = arith.addf %43, %45 : vector<16x128xf32>
    %c0_19 = arith.constant 0 : index
    %c0_20 = arith.constant 0 : index
    %47 = vector.load %arg6[%c0_19, %c0_20] : memref<16x128xf32, #tpu.memory_space<vmem>>, vector<16x128xf32>
    tpu.vector_store %arg6[%c0_19, %c0_20], %46 {strides = array<i32>} : memref<16x128xf32, #tpu.memory_space<vmem>>, vector<16x128xf32>,
    return
  }
  func.func @transform_0(%arg0: i32) -> (i32, i32) {
    %c0_i32 = arith.constant 0 : i32
    %c0_i32_0 = arith.constant 0 : i32
    return %arg0, %c0_i32 : i32, i32
  }
  func.func @transform_1(%arg0: i32) -> (i32, i32) {
    %c0_i32 = arith.constant 0 : i32
    %c0_i32_0 = arith.constant 0 : i32
    %c0_i32_1 = arith.constant 0 : i32
    return %c0_i32, %c0_i32_0 : i32, i32
  }
  func.func @transform_2(%arg0: i32) -> (i32, i32) {
    %c0_i32 = arith.constant 0 : i32
    %c0_i32_0 = arith.constant 0 : i32
    %c0_i32_1 = arith.constant 0 : i32
    return %c0_i32, %c0_i32_0 : i32, i32
  }
  func.func @transform_3(%arg0: i32) -> (i32, i32) {
    %c0_i32 = arith.constant 0 : i32
    %c0_i32_0 = arith.constant 0 : i32
    %c0_i32_1 = arith.constant 0 : i32
    return %c0_i32, %c0_i32_0 : i32, i32
  }
  func.func @transform_4(%arg0: i32) -> (i32, i32) {
    %c0_i32 = arith.constant 0 : i32
    %c0_i32_0 = arith.constant 0 : i32
    %c0_i32_1 = arith.constant 0 : i32
    return %c0_i32, %c0_i32_0 : i32, i32
  }
  func.func @transform_5(%arg0: i32) -> (i32, i32) {
    %c0_i32 = arith.constant 0 : i32
    %c0_i32_0 = arith.constant 0 : i32
    return %arg0, %c0_i32 : i32, i32
  }
}

</mosaic_0001>

<llo_original>
// kernel: tpu_custom_call.1
$region0: #{tpu_custom_call.1}
  #allocation0 [shape = 'u32[]', space=smem, size = 0x4, offset = 0x4, fixed_abs, tag = 'smem constant byte address 0x4 - core index']
  #allocation1 [shape = 'u32[144,128]{1,0:T(1,128)}', space=vmem, size = 0x12000, scoped, tag = 'internal scratch']
  %s0 = inlined_call_operand.hbm [shape: bf16[32,128], index: 0, kind: input, shape index: {}]
  %s1 = inlined_call_operand.hbm [shape: bf16[128,256], index: 1, kind: input, shape index: {}]
  %s2 = inlined_call_operand.hbm [shape: f32[3,256], index: 2, kind: input, shape index: {}]
  %s3 = inlined_call_operand.hbm [shape: bf16[256,128], index: 3, kind: input, shape index: {}]
  %s4 = inlined_call_operand.vmem [shape: f32[1,128], index: 4, kind: input, shape index: {}]
  %s5 = inlined_call_operand.hbm [shape: f32[32,128], index: 5, kind: output, shape index: {}]
  %s6 = sld [smem:[#allocation0]]
  $region69: #{tpu_custom_call.1} parent=0
    _
  %s8 = ssub.s32 1, %s6
  %s9 = scalar_select 0, %s8, %s6
  $region1: #{tpu_custom_call.1} parent=0
    #allocation2 [shape = 'u8[8192]{0}', space=vmem, size = 0x2000, scoped, tag = 'input window, operand 0']
    #allocation3 [shape = 's32[2]{0}', space=sflag, size = 0x8, scoped, tag = 'scoped memory for tpu_custom_call.1']
    #allocation4 [shape = 's32[2]{0}', space=sflag, size = 0x8, scoped, tag = 'scoped memory for tpu_custom_call.1']
    #allocation5 [shape = 'u8[65536]{0}', space=vmem, size = 0x10000, scoped, tag = 'input window, operand 1, single buffered']
    #allocation6 [shape = 's32[1]{0}', space=sflag, size = 0x4, scoped, tag = 'scoped memory for tpu_custom_call.1']
    #allocation7 [shape = 'u8[4096]{0}', space=vmem, size = 0x1000, scoped, tag = 'input window, operand 2, single buffered']
    #allocation8 [shape = 'u8[65536]{0}', space=vmem, size = 0x10000, scoped, tag = 'input window, operand 3, single buffered']
    #allocation9 [shape = 's32[1]{0}', space=sflag, size = 0x4, scoped, tag = 'scoped memory for tpu_custom_call.1']
    #allocation10 [shape = 'u8[16384]{0}', space=vmem, size = 0x4000, scoped, tag = 'output window, operand 0']
    %10 = vsyncpa [#allocation3], 0
    %s11 = scalar_lea.sflag [#allocation3], 1
    %12 = vsyncpa %s11, 0
    %13 = vsyncpa [#allocation6], 0
    %14 = vsyncpa [#allocation9], 0
    %15 = vsyncpa [#allocation4], 0
    %s16 = scalar_lea.sflag [#allocation4], 1
    %17 = vsyncpa %s16, 0
    loop: start=0, step=1, limit=4
    $region2: #{tpu_custom_call.1} parent=1 // loop_pre_header
      _
    $region3: #{tpu_custom_call.1} parent=1 // loop_header
      %s19 = sphi 0, %s23
      %p20 = scmp.ge.s32.totalorder %s19, 4
      %s29 = sphi 0, %s31
      %s32 = sphi 0, %s29
      %s33 = sphi 0, %s32
      %s49 = sphi 0, %s33
      %s53 = sphi 0, %s53
      %s55 = sphi 0, %s53
      %s56 = sphi 0, %s55
      %s70 = sphi 0, %s56
      %s74 = sphi 0, %s74
      %s76 = sphi 0, %s74
      %s77 = sphi 0, %s76
      %s91 = sphi 0, %s77
      %s95 = sphi 0, %s95
      %s97 = sphi 0, %s95
      %s98 = sphi 0, %s97
      %s112 = sphi 0, %s98
      %s116 = sphi 0, %s116
      %s118 = sphi 0, %s116
      %s119 = sphi 0, %s118
      %s133 = sphi 0, %s119
      %s139 = sphi 0, %s141
      %s142 = sphi 0, %s139
      %s143 = sphi 0, %s142
      %s159 = sphi 0, %s143
    $region4: #{tpu_custom_call.1} parent=1 // loop_header_branch
      %22 = sbr.rel (%p20) target = $region8
    $region5: #{tpu_custom_call.1} parent=1 // loop_body
      %s24 = ssub.s32 %s19, 1
      %s25 = ssub.s32 %s19, 2
      %s26 = sadd.s32 %s19, 1
      %s27 = ssub.s32 %s19, %s26
      %p28 = scmp.eq.s32.totalorder %s27, 0
      %s30 = sadd.s32 %s29, 1
      %s31 = scalar_select %p28, %s29, %s30
      %p34 = pneg %p28
      %p35 = scmp.eq.s32.totalorder %s19, 1
      %p36 = por %p34, %p35
      %p37 = scmp.ne.s32.totalorder %s29, %s32
      %p38 = scmp.eq.s32.totalorder %s19, 0
      %p39 = por %p37, %p38
      %p40 = scmp.ne.s32.totalorder %s29, %s32
      %p41 = scmp.eq.s32.totalorder %s24, 1
      %p42 = por %p40, %p41
      %p43 = scmp.ne.s32.totalorder %s32, %s33
      %p44 = scmp.eq.s32.totalorder %s24, 0
      %p45 = por %p43, %p44
      %p46 = scmp.ne.s32.totalorder %s32, %s33
      %p47 = scmp.eq.s32.totalorder %s25, 1
      %p48 = por %p46, %p47
      %p50 = scmp.ne.s32.totalorder %s33, %s49
      %p51 = scmp.eq.s32.totalorder %s25, 0
      %p52 = por %p50, %p51
      %s54 = sadd.s32 %s53, 1
      %p57 = scmp.eq.s32.totalorder %s19, 1
      %p58 = scmp.ne.s32.totalorder %s53, %s55
      %p59 = scmp.eq.s32.totalorder %s19, 0
      %p60 = por %p58, %p59
      %p61 = scmp.ne.s32.totalorder %s53, %s55
      %p62 = scmp.eq.s32.totalorder %s24, 1
      %p63 = por %p61, %p62
      %p64 = scmp.ne.s32.totalorder %s55, %s56
      %p65 = scmp.eq.s32.totalorder %s24, 0
      %p66 = por %p64, %p65
      %p67 = scmp.ne.s32.totalorder %s55, %s56
      %p68 = scmp.eq.s32.totalorder %s25, 1
      %p69 = por %p67, %p68
      %p71 = scmp.ne.s32.totalorder %s56, %s70
      %p72 = scmp.eq.s32.totalorder %s25, 0
      %p73 = por %p71, %p72
      %s75 = sadd.s32 %s74, 1
      %p78 = scmp.eq.s32.totalorder %s19, 1
      %p79 = scmp.ne.s32.totalorder %s74, %s76
      %p80 = scmp.eq.s32.totalorder %s19, 0
      %p81 = por %p79, %p80
      %p82 = scmp.ne.s32.totalorder %s74, %s76
      %p83 = scmp.eq.s32.totalorder %s24, 1
      %p84 = por %p82, %p83
      %p85 = scmp.ne.s32.totalorder %s76, %s77
      %p86 = scmp.eq.s32.totalorder %s24, 0
      %p87 = por %p85, %p86
      %p88 = scmp.ne.s32.totalorder %s76, %s77
      %p89 = scmp.eq.s32.totalorder %s25, 1
      %p90 = por %p88, %p89
      %p92 = scmp.ne.s32.totalorder %s77, %s91
      %p93 = scmp.eq.s32.totalorder %s25, 0
      %p94 = por %p92, %p93
      %s96 = sadd.s32 %s95, 1
      %p99 = scmp.eq.s32.totalorder %s19, 1
      %p100 = scmp.ne.s32.totalorder %s95, %s97
      %p101 = scmp.eq.s32.totalorder %s19, 0
      %p102 = por %p100, %p101
      %p103 = scmp.ne.s32.totalorder %s95, %s97
      %p104 = scmp.eq.s32.totalorder %s24, 1
      %p105 = por %p103, %p104
      %p106 = scmp.ne.s32.totalorder %s97, %s98
      %p107 = scmp.eq.s32.totalorder %s24, 0
      %p108 = por %p106, %p107
      %p109 = scmp.ne.s32.totalorder %s97, %s98
      %p110 = scmp.eq.s32.totalorder %s25, 1
      %p111 = por %p109, %p110
      %p113 = scmp.ne.s32.totalorder %s98, %s112
      %p114 = scmp.eq.s32.totalorder %s25, 0
      %p115 = por %p113, %p114
      %s117 = sadd.s32 %s116, 1
      %p120 = scmp.eq.s32.totalorder %s19, 1
      %p121 = scmp.ne.s32.totalorder %s116, %s118
      %p122 = scmp.eq.s32.totalorder %s19, 0
      %p123 = por %p121, %p122
      %p124 = scmp.ne.s32.totalorder %s116, %s118
      %p125 = scmp.eq.s32.totalorder %s24, 1
      %p126 = por %p124, %p125
      %p127 = scmp.ne.s32.totalorder %s118, %s119
      %p128 = scmp.eq.s32.totalorder %s24, 0
      %p129 = por %p127, %p128
      %p130 = scmp.ne.s32.totalorder %s118, %s119
      %p131 = scmp.eq.s32.totalorder %s25, 1
      %p132 = por %p130, %p131
      %p134 = scmp.ne.s32.totalorder %s119, %s133
      %p135 = scmp.eq.s32.totalorder %s25, 0
      %p136 = por %p134, %p135
      %s137 = ssub.s32 %s19, %s26
      %p138 = scmp.eq.s32.totalorder %s137, 0
      %s140 = sadd.s32 %s139, 1
      %s141 = scalar_select %p138, %s139, %s140
      %p144 = pneg %p138
      %p145 = scmp.eq.s32.totalorder %s19, 1
      %p146 = por %p144, %p145
      %p147 = scmp.ne.s32.totalorder %s139, %s142
      %p148 = scmp.eq.s32.totalorder %s19, 0
      %p149 = por %p147, %p148
      %p150 = scmp.ne.s32.totalorder %s139, %s142
      %p151 = scmp.eq.s32.totalorder %s24, 1
      %p152 = por %p150, %p151
      %p153 = scmp.ne.s32.totalorder %s142, %s143
      %p154 = scmp.eq.s32.totalorder %s24, 0
      %p155 = por %p153, %p154
      %p156 = scmp.ne.s32.totalorder %s142, %s143
      %p157 = scmp.eq.s32.totalorder %s25, 1
      %p158 = por %p156, %p157
      %p160 = scmp.ne.s32.totalorder %s143, %s159
      %p161 = scmp.eq.s32.totalorder %s25, 0
      %p162 = por %p160, %p161
      %p163 = scmp.le.s32.totalorder 1, %s19
      %p164 = scmp.lt.s32.totalorder %s19, 3
      %p165 = pnand %p163, %p164
      %p166 = pneg %p165
      // Predicated region
      $region9: #{tpu_custom_call.1} parent=5 // pred_check
        _
      $region10: #{tpu_custom_call.1} parent=5 // pred_check_branch
        %168 = sbr.rel (%p165) target = $region12
      $region11: #{tpu_custom_call.1} parent=5 // pred_region
        %s169 = ssub.s32 %s19, 1
        // Predicated region
        $region13: #{tpu_custom_call.1} parent=11 // pred_check
          %p170 = pneg %p66
        $region14: #{tpu_custom_call.1} parent=11 // pred_check_branch
          %172 = sbr.rel (%p170) target = $region16
        $region15: #{tpu_custom_call.1} parent=11 // pred_region
          %s174 = ssub.s32 2048, 2048
          %175 = vsyncadd [#allocation6], %s174
          %s176 = sshll.u32 [#allocation5], 4
          %s177 = int_to_ptr.vmem [resolvable:$true] %s176
          %182 = dma.hbm_to_vmem [thread:$0]  %s1, 2048, %s177, [#allocation6], 128, 128, 8
        $region16: #{tpu_custom_call.1} parent=11 // pred_fallthru
          _
        // Predicated region
        $region17: #{tpu_custom_call.1} parent=11 // pred_check
          %p183 = pneg %p87
        $region18: #{tpu_custom_call.1} parent=11 // pred_check_branch
          %185 = sbr.rel (%p183) target = $region20
        $region19: #{tpu_custom_call.1} parent=11 // pred_region
          %s187 = ssub.s32 128, 128
          %188 = vsyncadd [#allocation6], %s187
          %s190 = sshll.u32 [#allocation7], 4
          %s191 = int_to_ptr.vmem [resolvable:$true] %s190
          %193 = dma.hbm_to_vmem [thread:$0]  %s2, 128, %s191, [#allocation6]
        $region20: #{tpu_custom_call.1} parent=11 // pred_fallthru
          _
        // Predicated region
        $region21: #{tpu_custom_call.1} parent=11 // pred_check
          %p194 = pneg %p108
        $region22: #{tpu_custom_call.1} parent=11 // pred_check_branch
          %196 = sbr.rel (%p194) target = $region24
        $region23: #{tpu_custom_call.1} parent=11 // pred_region
          %s198 = ssub.s32 2048, 2048
          %199 = vsyncadd [#allocation9], %s198
          %s200 = sshll.u32 [#allocation8], 4
          %s201 = int_to_ptr.vmem [resolvable:$true] %s200
          %206 = dma.hbm_to_vmem [thread:$0]  %s3, 2048, %s201, [#allocation9], 64, 64, 4
        $region24: #{tpu_custom_call.1} parent=11 // pred_fallthru
          _
        // Predicated region
        $region25: #{tpu_custom_call.1} parent=11 // pred_check
          %p207 = pneg %p129
        $region26: #{tpu_custom_call.1} parent=11 // pred_check_branch
          %209 = sbr.rel (%p207) target = $region28
        $region27: #{tpu_custom_call.1} parent=11 // pred_region
          _
        $region28: #{tpu_custom_call.1} parent=11 // pred_fallthru
          _
      $region12: #{tpu_custom_call.1} parent=5 // pred_fallthru
        _
      %p210 = scmp.lt.s32.totalorder %s19, 2
      // Predicated region
      $region29: #{tpu_custom_call.1} parent=5 // pred_check
        %p211 = pneg %p210
      $region30: #{tpu_custom_call.1} parent=5 // pred_check_branch
        %213 = sbr.rel (%p211) target = $region32
      $region31: #{tpu_custom_call.1} parent=5 // pred_region
        // Predicated region
        $region33: #{tpu_custom_call.1} parent=31 // pred_check
          %p214 = pneg %p39
        $region34: #{tpu_custom_call.1} parent=31 // pred_check_branch
          %216 = sbr.rel (%p214) target = $region36
        $region35: #{tpu_custom_call.1} parent=31 // pred_region
          %s217 = sand.u32 %s29, 1
          %s218 = scalar_lea.sflag [#allocation3], %s217
          %s219 = sand.u32 %s29, 1
          %s220 = smul.addr %s219, 8
          %s221 = scalar_lea.vmem [#allocation2], %s220
          %s222 = smul.u32 2, %s19
          %s224 = ssub.s32 128, 128
          %225 = vsyncadd %s218, %s224
          %s226 = smul.addr %s222, 64
          %s227 = scalar_lea.hbm %s0, %s226
          %s228 = sshll.u32 %s221, 4
          %s229 = int_to_ptr.vmem [resolvable:$true] %s228
          %234 = dma.hbm_to_vmem [thread:$0]  %s227, 128, %s229, %s218, 64, 64, 4
        $region36: #{tpu_custom_call.1} parent=31 // pred_fallthru
          _
      $region32: #{tpu_custom_call.1} parent=5 // pred_fallthru
        _
      %p235 = scmp.le.s32.totalorder 1, %s19
      %p236 = scmp.lt.s32.totalorder %s19, 3
      %p237 = pnand %p235, %p236
      %p238 = pneg %p237
      // Predicated region
      $region37: #{tpu_custom_call.1} parent=5 // pred_check
        _
      $region38: #{tpu_custom_call.1} parent=5 // pred_check_branch
        %240 = sbr.rel (%p237) target = $region40
      $region39: #{tpu_custom_call.1} parent=5 // pred_region
        %s241 = ssub.s32 %s19, 1
        %s242 = sand.u32 %s32, 1
        %s243 = scalar_lea.sflag [#allocation3], %s242
        %s244 = sand.u32 %s32, 1
        %s245 = smul.addr %s244, 8
        %s246 = scalar_lea.vmem [#allocation2], %s245
        // Predicated region
        $region41: #{tpu_custom_call.1} parent=39 // pred_check
          %p247 = pneg %p45
        $region42: #{tpu_custom_call.1} parent=39 // pred_check_branch
          %249 = sbr.rel (%p247) target = $region44
        $region43: #{tpu_custom_call.1} parent=39 // pred_region
          %250 = dma.done %s243, 128
        $region44: #{tpu_custom_call.1} parent=39 // pred_fallthru
          _
        // Predicated region
        $region45: #{tpu_custom_call.1} parent=39 // pred_check
          %p251 = pneg %p66
        $region46: #{tpu_custom_call.1} parent=39 // pred_check_branch
          %253 = sbr.rel (%p251) target = $region48
        $region47: #{tpu_custom_call.1} parent=39 // pred_region
          %254 = dma.done [#allocation6], 2048
        $region48: #{tpu_custom_call.1} parent=39 // pred_fallthru
          _
        // Predicated region
        $region49: #{tpu_custom_call.1} parent=39 // pred_check
          %p255 = pneg %p87
        $region50: #{tpu_custom_call.1} parent=39 // pred_check_branch
          %257 = sbr.rel (%p255) target = $region52
        $region51: #{tpu_custom_call.1} parent=39 // pred_region
          %258 = dma.done [#allocation6], 128
        $region52: #{tpu_custom_call.1} parent=39 // pred_fallthru
          _
        // Predicated region
        $region53: #{tpu_custom_call.1} parent=39 // pred_check
          %p259 = pneg %p108
        $region54: #{tpu_custom_call.1} parent=39 // pred_check_branch
          %261 = sbr.rel (%p259) target = $region56
        $region55: #{tpu_custom_call.1} parent=39 // pred_region
          %262 = dma.done [#allocation9], 2048
        $region56: #{tpu_custom_call.1} parent=39 // pred_fallthru
          _
        %s263 = sand.u32 %s32, 1
        %s264 = scalar_lea.sflag [#allocation3], %s263
        %s265 = sand.u32 %s32, 1
        %s266 = smul.addr %s265, 8
        %s267 = scalar_lea.vmem [#allocation2], %s266
        %p268 = pneg %p45
        %p269 = pneg %p42
        %p270 = pneg %p66
        %p271 = pneg %p63
        %p272 = pneg %p87
        %p273 = pneg %p84
        %p274 = pneg %p108
        %p275 = pneg %p105
        %p276 = pneg %p129
        %p277 = pneg %p126
        %p278 = pneg %p155
        %p279 = pneg %p152
        %s280 = sand.u32 %s142, 1
        %s281 = scalar_lea.sflag [#allocation4], %s280
        %s282 = sand.u32 %s142, 1
        %s283 = smul.addr %s282, 16
        %s284 = scalar_lea.vmem [#allocation10], %s283
        %s285 = smul.u32 2, %s24
        %s286 = smul.u32 2, %s24
        %v288 = vld [vmem:[#allocation7] sm:$0x77]
        %v289 = vld [vmem:[%s246] sm:$0xf]
        %v290 = vld [vmem:[%s246 + $0x4] sm:$0xf]
        %v291 = vld [vmem:[#allocation5] sm:$0xff]
        %v292 = vld [vmem:[#allocation5 + $0x8] sm:$0xff]
        %v293 = vld [vmem:[#allocation5 + $0x10] sm:$0xff]
        %v294 = vld [vmem:[#allocation5 + $0x18] sm:$0xff]
        %v295 = vld [vmem:[#allocation5 + $0x20] sm:$0xff]
        %v296 = vld [vmem:[#allocation5 + $0x28] sm:$0xff]
        %v297 = vld [vmem:[#allocation5 + $0x30] sm:$0xff]
        %v298 = vld [vmem:[#allocation5 + $0x38] sm:$0xff]
        %v299 = vld [vmem:[#allocation5 + $0x40] sm:$0xff]
        %v300 = vld [vmem:[#allocation5 + $0x48] sm:$0xff]
        %v301 = vld [vmem:[#allocation5 + $0x50] sm:$0xff]
        %v302 = vld [vmem:[#allocation5 + $0x58] sm:$0xff]
        %v303 = vld [vmem:[#allocation5 + $0x60] sm:$0xff]
        %v304 = vld [vmem:[#allocation5 + $0x68] sm:$0xff]
        %v305 = vld [vmem:[#allocation5 + $0x70] sm:$0xff]
        %v306 = vld [vmem:[#allocation5 + $0x78] sm:$0xff]
        %v308 = vlaneseq
        %v309 = vshrl.u32 %v308, 7
        %v310 = vsub.s32 0, %v309
        %v311 = vrot.slane %v288, %v310
        %v312 = vlaneseq
        %v313 = vshrl.u32 %v312, 7
        %v314 = vsub.s32 4, %v313
        %v315 = vrot.slane %v288, %v314
        %v318 = vlaneseq
        %v319 = vshrl.u32 %v318, 7
        %v320 = vsub.s32 0, %v319
        %v321 = vrot.slane %v311, %v320
        %v322 = vlaneseq
        %v323 = vshrl.u32 %v322, 7
        %v324 = vsub.s32 0, %v323
        %v325 = vrot.slane %v315, %v324
        %v328 = vunpack.c.l.b16 %v289
        %v329 = vunpack.c.l.b16 %v290
        %v330 = vpack.c.b16 %v329, %v328
        %v348 = vunpack.c.l.b16 %v291
        %v349 = vunpack.c.h.b16 %v291
        %v350 = vunpack.c.l.b16 %v292
        %v351 = vunpack.c.h.b16 %v292
        %v352 = vunpack.c.l.b16 %v293
        %v353 = vunpack.c.h.b16 %v293
        %v354 = vunpack.c.l.b16 %v294
        %v355 = vunpack.c.h.b16 %v294
        %v356 = vunpack.c.l.b16 %v295
        %v357 = vunpack.c.h.b16 %v295
        %v358 = vunpack.c.l.b16 %v296
        %v359 = vunpack.c.h.b16 %v296
        %v360 = vunpack.c.l.b16 %v297
        %v361 = vunpack.c.h.b16 %v297
        %v362 = vunpack.c.l.b16 %v298
        %v363 = vunpack.c.h.b16 %v298
        %v364 = vunpack.c.l.b16 %v299
        %v365 = vunpack.c.h.b16 %v299
        %v366 = vunpack.c.l.b16 %v300
        %v367 = vunpack.c.h.b16 %v300
        %v368 = vunpack.c.l.b16 %v301
        %v369 = vunpack.c.h.b16 %v301
        %v370 = vunpack.c.l.b16 %v302
        %v371 = vunpack.c.h.b16 %v302
        %v372 = vunpack.c.l.b16 %v303
        %v373 = vunpack.c.h.b16 %v303
        %v374 = vunpack.c.l.b16 %v304
        %v375 = vunpack.c.h.b16 %v304
        %v376 = vunpack.c.l.b16 %v305
        %v377 = vunpack.c.h.b16 %v305
        %v378 = vunpack.c.l.b16 %v306
        %v379 = vunpack.c.h.b16 %v306
        %v380 = vpack.c.b16 %v350, %v348
        %v381 = vpack.c.b16 %v351, %v349
        %v382 = vpack.c.b16 %v354, %v352
        %v383 = vpack.c.b16 %v355, %v353
        %v384 = vpack.c.b16 %v358, %v356
        %v385 = vpack.c.b16 %v359, %v357
        %v386 = vpack.c.b16 %v362, %v360
        %v387 = vpack.c.b16 %v363, %v361
        %v388 = vpack.c.b16 %v366, %v364
        %v389 = vpack.c.b16 %v367, %v365
        %v390 = vpack.c.b16 %v370, %v368
        %v391 = vpack.c.b16 %v371, %v369
        %v392 = vpack.c.b16 %v374, %v372
        %v393 = vpack.c.b16 %v375, %v373
        %v394 = vpack.c.b16 %v378, %v376
        %v395 = vpack.c.b16 %v379, %v377
        %412 = vmatprep.subr.bf16.mxu0 %v381
        %413 = vmatpush1.bf16.msra.mxu0 %v380
        %414 = vmatprep.subr.bf16.mxu0 %v383
        %415 = vmatpush1.bf16.msra.mxu0 %v382
        %416 = vmatprep.subr.bf16.mxu0 %v385
        %417 = vmatpush1.bf16.msra.mxu0 %v384
        %418 = vmatprep.subr.bf16.mxu0 %v387
        %419 = vmatpush1.bf16.msra.mxu0 %v386
        %420 = vmatprep.subr.bf16.mxu0 %v389
        %421 = vmatpush1.bf16.msra.mxu0 %v388
        %422 = vmatprep.subr.bf16.mxu0 %v391
        %423 = vmatpush1.bf16.msra.mxu0 %v390
        %424 = vmatprep.subr.bf16.mxu0 %v393
        %425 = vmatpush1.bf16.msra.mxu0 %v392
        %426 = vmatprep.subr.bf16.mxu0 %v395
        %427 = vmatpush1.bf16.msra.mxu0 %v394
        %428 = vmatprep.subr.bf16.mxu0 0
        %429 = vmatpush1.bf16.msra.mxu0 0
        %430 = vmatprep.subr.bf16.mxu0 0
        %431 = vmatpush1.bf16.msra.mxu0 0
        %432 = vmatprep.subr.bf16.mxu0 0
        %433 = vmatpush1.bf16.msra.mxu0 0
        %434 = vmatprep.subr.bf16.mxu0 0
        %435 = vmatpush1.bf16.msra.mxu0 0
        %436 = vmatprep.subr.bf16.mxu0 0
        %437 = vmatpush1.bf16.msra.mxu0 0
        %438 = vmatprep.subr.bf16.mxu0 0
        %439 = vmatpush1.bf16.msra.mxu0 0
        %440 = vmatprep.subr.bf16.mxu0 0
        %441 = vmatpush1.bf16.msra.mxu0 0
        %442 = vmatprep.subr.bf16.mxu0 0
        %443 = vmatpush1.bf16.msra.mxu0 0
        %444 = vmatprep.mubr.bf16.mxu0 0
        %445 = vmatmul.mubr.bf16.gmra.mrb[0].mxu0 %v330
        %v446 = vpop.f32.mrb[0].mxu0
        %v447 = vadd.f32 %v321, %v446
        %v448 = vpop.f32.mrb[0].mxu0
        %v449 = vadd.f32 %v325, %v448
        %v450 = vpop.f32.mrb[0].mxu0
        %v451 = vadd.f32 %v321, %v450
        %v452 = vpop.f32.mrb[0].mxu0
        %v453 = vadd.f32 %v325, %v452
        %454 = vdwg.mxu0
        %v455 = vmul.f32 %v447, 0.5
        %v456 = vmul.f32 %v449, 0.5
        %v457 = vmul.f32 %v451, 0.5
        %v458 = vmul.f32 %v453, 0.5
        %v459 = vmul.f32 %v447, 0.70710677
        %v460 = vmul.f32 %v449, 0.70710677
        %v461 = vmul.f32 %v451, 0.70710677
        %v462 = vmul.f32 %v453, 0.70710677
        %v463 = verf.f32.pop %v459
        %v464 = verf.f32.pop %v460
        %v465 = verf.f32.pop %v461
        %v466 = verf.f32.pop %v462
        %v467 = vadd.f32 %v463, 1.0
        %v468 = vadd.f32 %v464, 1.0
        %v469 = vadd.f32 %v465, 1.0
        %v470 = vadd.f32 %v466, 1.0
        %v471 = vmul.f32 %v455, %v467
        %v472 = vmul.f32 %v456, %v468
        %v473 = vmul.f32 %v457, %v469
        %v474 = vmul.f32 %v458, %v470
        %v475 = vadd.f32 %v471, %v472
        %476 = vadd.xlane.f32.xlu0 %v475
        %v477 = vpop.xlane.xlu0 %476
        %v478 = vadd.f32 %v473, %v474
        %479 = vadd.xlane.f32.xlu0 %v478
        %v480 = vpop.xlane.xlu0 %479
        %v481 = vmul.f32 %v477, 0.00390625
        %v482 = vmul.f32 %v480, 0.00390625
        %v483 = vmul.f32 %v471, %v471
        %v484 = vmul.f32 %v472, %v472
        %v485 = vmul.f32 %v473, %v473
        %v486 = vmul.f32 %v474, %v474
        %v487 = vadd.f32 %v483, %v484
        %488 = vadd.xlane.f32.xlu0 %v487
        %v489 = vpop.xlane.xlu0 %488
        %v490 = vadd.f32 %v485, %v486
        %491 = vadd.xlane.f32.xlu0 %v490
        %v492 = vpop.xlane.xlu0 %491
        %v493 = vmul.f32 %v489, 0.00390625
        %v494 = vmul.f32 %v492, 0.00390625
        %v495 = vmul.f32 %v481, %v481
        %v496 = vmul.f32 %v482, %v482
        %v497 = vsub.f32 %v493, %v495
        %v498 = vsub.f32 %v494, %v496
        %v499 = vmax.f32 %v497, 0.0
        %v500 = vmax.f32 %v498, 0.0
        %v501 = vadd.f32 %v499, 1e-06
        %v502 = vadd.f32 %v500, 1e-06
        %v503 = vrsqrt.pop %v501
        %v504 = vrsqrt.pop %v502
        %v505 = vsub.f32 %v471, %v481
        %v506 = vsub.f32 %v472, %v481
        %v507 = vsub.f32 %v473, %v482
        %v508 = vsub.f32 %v474, %v482
        %v509 = vlaneseq
        %v510 = vshrl.u32 %v509, 7
        %v511 = vsub.s32 1, %v510
        %v512 = vrot.slane %v288, %v511
        %v513 = vlaneseq
        %v514 = vshrl.u32 %v513, 7
        %v515 = vsub.s32 5, %v514
        %v516 = vrot.slane %v288, %v515
        %v519 = vlaneseq
        %v520 = vshrl.u32 %v519, 7
        %v521 = vsub.s32 1, %v520
        %v522 = vrot.slane %v512, %v521
        %v523 = vlaneseq
        %v524 = vshrl.u32 %v523, 7
        %v525 = vsub.s32 1, %v524
        %v526 = vrot.slane %v516, %v525
        %v527 = vmul.f32 %v503, %v522
        %v528 = vmul.f32 %v503, %v526
        %v529 = vmul.f32 %v504, %v522
        %v530 = vmul.f32 %v504, %v526
        %v531 = vmul.f32 %v505, %v527
        %v532 = vmul.f32 %v506, %v528
        %v533 = vmul.f32 %v507, %v529
        %v534 = vmul.f32 %v508, %v530
        %v535 = vlaneseq
        %v536 = vshrl.u32 %v535, 7
        %v537 = vsub.s32 2, %v536
        %v538 = vrot.slane %v288, %v537
        %v539 = vlaneseq
        %v540 = vshrl.u32 %v539, 7
        %v541 = vsub.s32 6, %v540
        %v542 = vrot.slane %v288, %v541
        %v545 = vlaneseq
        %v546 = vshrl.u32 %v545, 7
        %v547 = vsub.s32 2, %v546
        %v548 = vrot.slane %v538, %v547
        %v549 = vlaneseq
        %v550 = vshrl.u32 %v549, 7
        %v551 = vsub.s32 2, %v550
        %v552 = vrot.slane %v542, %v551
        %v553 = vadd.f32 %v531, %v548
        %v554 = vadd.f32 %v532, %v552
        %v555 = vadd.f32 %v533, %v548
        %v556 = vadd.f32 %v534, %v552
        %v557 = vpack.c.bf16 %v555, %v553
        %v558 = vpack.c.bf16 %v556, %v554
        %v559 = vld [vmem:[#allocation8] sm:$0xf]
        %v560 = vld [vmem:[#allocation8 + $0x4] sm:$0xf]
        %v561 = vld [vmem:[#allocation8 + $0x8] sm:$0xf]
        %v562 = vld [vmem:[#allocation8 + $0xc] sm:$0xf]
        %v563 = vld [vmem:[#allocation8 + $0x10] sm:$0xf]
        %v564 = vld [vmem:[#allocation8 + $0x14] sm:$0xf]
        %v565 = vld [vmem:[#allocation8 + $0x18] sm:$0xf]
        %v566 = vld [vmem:[#allocation8 + $0x1c] sm:$0xf]
        %v567 = vld [vmem:[#allocation8 + $0x20] sm:$0xf]
        %v568 = vld [vmem:[#allocation8 + $0x24] sm:$0xf]
        %v569 = vld [vmem:[#allocation8 + $0x28] sm:$0xf]
        %v570 = vld [vmem:[#allocation8 + $0x2c] sm:$0xf]
        %v571 = vld [vmem:[#allocation8 + $0x30] sm:$0xf]
        %v572 = vld [vmem:[#allocation8 + $0x34] sm:$0xf]
        %v573 = vld [vmem:[#allocation8 + $0x38] sm:$0xf]
        %v574 = vld [vmem:[#allocation8 + $0x3c] sm:$0xf]
        %v575 = vld [vmem:[#allocation8 + $0x40] sm:$0xf]
        %v576 = vld [vmem:[#allocation8 + $0x44] sm:$0xf]
        %v577 = vld [vmem:[#allocation8 + $0x48] sm:$0xf]
        %v578 = vld [vmem:[#allocation8 + $0x4c] sm:$0xf]
        %v579 = vld [vmem:[#allocation8 + $0x50] sm:$0xf]
        %v580 = vld [vmem:[#allocation8 + $0x54] sm:$0xf]
        %v581 = vld [vmem:[#allocation8 + $0x58] sm:$0xf]
        %v582 = vld [vmem:[#allocation8 + $0x5c] sm:$0xf]
        %v583 = vld [vmem:[#allocation8 + $0x60] sm:$0xf]
        %v584 = vld [vmem:[#allocation8 + $0x64] sm:$0xf]
        %v585 = vld [vmem:[#allocation8 + $0x68] sm:$0xf]
        %v586 = vld [vmem:[#allocation8 + $0x6c] sm:$0xf]
        %v587 = vld [vmem:[#allocation8 + $0x70] sm:$0xf]
        %v588 = vld [vmem:[#allocation8 + $0x74] sm:$0xf]
        %v589 = vld [vmem:[#allocation8 + $0x78] sm:$0xf]
        %v590 = vld [vmem:[#allocation8 + $0x7c] sm:$0xf]
        %v591 = vld [vmem:[%s4] sm:$0x1]
        %v593 = vlaneseq
        %v594 = vshrl.u32 %v593, 7
        %v595 = vsub.s32 0, %v594
        %v596 = vrot.slane %v591, %v595
        %v630 = vunpack.c.l.b16 %v559
        %v631 = vunpack.c.l.b16 %v560
        %v632 = vunpack.c.l.b16 %v561
        %v633 = vunpack.c.l.b16 %v562
        %v634 = vunpack.c.l.b16 %v563
        %v635 = vunpack.c.l.b16 %v564
        %v636 = vunpack.c.l.b16 %v565
        %v637 = vunpack.c.l.b16 %v566
        %v638 = vunpack.c.l.b16 %v567
        %v639 = vunpack.c.l.b16 %v568
        %v640 = vunpack.c.l.b16 %v569
        %v641 = vunpack.c.l.b16 %v570
        %v642 = vunpack.c.l.b16 %v571
        %v643 = vunpack.c.l.b16 %v572
        %v644 = vunpack.c.l.b16 %v573
        %v645 = vunpack.c.l.b16 %v574
        %v646 = vunpack.c.l.b16 %v575
        %v647 = vunpack.c.l.b16 %v576
        %v648 = vunpack.c.l.b16 %v577
        %v649 = vunpack.c.l.b16 %v578
        %v650 = vunpack.c.l.b16 %v579
        %v651 = vunpack.c.l.b16 %v580
        %v652 = vunpack.c.l.b16 %v581
        %v653 = vunpack.c.l.b16 %v582
        %v654 = vunpack.c.l.b16 %v583
        %v655 = vunpack.c.l.b16 %v584
        %v656 = vunpack.c.l.b16 %v585
        %v657 = vunpack.c.l.b16 %v586
        %v658 = vunpack.c.l.b16 %v587
        %v659 = vunpack.c.l.b16 %v588
        %v660 = vunpack.c.l.b16 %v589
        %v661 = vunpack.c.l.b16 %v590
        %v662 = vpack.c.b16 %v631, %v630
        %v663 = vpack.c.b16 %v633, %v632
        %v664 = vpack.c.b16 %v635, %v634
        %v665 = vpack.c.b16 %v637, %v636
        %v666 = vpack.c.b16 %v639, %v638
        %v667 = vpack.c.b16 %v641, %v640
        %v668 = vpack.c.b16 %v643, %v642
        %v669 = vpack.c.b16 %v645, %v644
        %v670 = vpack.c.b16 %v647, %v646
        %v671 = vpack.c.b16 %v649, %v648
        %v672 = vpack.c.b16 %v651, %v650
        %v673 = vpack.c.b16 %v653, %v652
        %v674 = vpack.c.b16 %v655, %v654
        %v675 = vpack.c.b16 %v657, %v656
        %v676 = vpack.c.b16 %v659, %v658
        %v677 = vpack.c.b16 %v661, %v660
        %694 = vmatprep.subr.bf16.mxu0 0
        %695 = vmatpush1.bf16.msra.mxu0 %v662
        %696 = vmatprep.subr.bf16.mxu0 0
        %697 = vmatpush1.bf16.msra.mxu0 %v663
        %698 = vmatprep.subr.bf16.mxu0 0
        %699 = vmatpush1.bf16.msra.mxu0 %v664
        %700 = vmatprep.subr.bf16.mxu0 0
        %701 = vmatpush1.bf16.msra.mxu0 %v665
        %702 = vmatprep.subr.bf16.mxu0 0
        %703 = vmatpush1.bf16.msra.mxu0 %v666
        %704 = vmatprep.subr.bf16.mxu0 0
        %705 = vmatpush1.bf16.msra.mxu0 %v667
        %706 = vmatprep.subr.bf16.mxu0 0
        %707 = vmatpush1.bf16.msra.mxu0 %v668
        %708 = vmatprep.subr.bf16.mxu0 0
        %709 = vmatpush1.bf16.msra.mxu0 %v669
        %710 = vmatprep.subr.bf16.mxu0 0
        %711 = vmatpush1.bf16.msra.mxu0 %v670
        %712 = vmatprep.subr.bf16.mxu0 0
        %713 = vmatpush1.bf16.msra.mxu0 %v671
        %714 = vmatprep.subr.bf16.mxu0 0
        %715 = vmatpush1.bf16.msra.mxu0 %v672
        %716 = vmatprep.subr.bf16.mxu0 0
        %717 = vmatpush1.bf16.msra.mxu0 %v673
        %718 = vmatprep.subr.bf16.mxu0 0
        %719 = vmatpush1.bf16.msra.mxu0 %v674
        %720 = vmatprep.subr.bf16.mxu0 0
        %721 = vmatpush1.bf16.msra.mxu0 %v675
        %722 = vmatprep.subr.bf16.mxu0 0
        %723 = vmatpush1.bf16.msra.mxu0 %v676
        %724 = vmatprep.subr.bf16.mxu0 0
        %725 = vmatpush1.bf16.msra.mxu0 %v677
        %726 = vmatprep.mubr.bf16.mxu0 %v558
        %727 = vmatmul.mubr.bf16.gmra.mrb[0].mxu0 %v557
        %v728 = vpop.f32.mrb[0].mxu0
        %v729 = vadd.f32 %v596, %v728
        %v730 = vpop.f32.mrb[0].mxu0
        %v731 = vpop.f32.mrb[0].mxu0
        %v732 = vadd.f32 %v596, %v731
        %v733 = vpop.f32.mrb[0].mxu0
        %734 = vdwg.mxu0
        %735 = vst [vmem:[%s284] sm:$0xff] %v729
        %736 = vst [vmem:[%s284 + $0x8] sm:$0xff] %v732
        %s737 = sand.u32 %s142, 1
        %s738 = scalar_lea.sflag [#allocation4], %s737
        %s739 = sand.u32 %s142, 1
        %s740 = smul.addr %s739, 16
        %s741 = scalar_lea.vmem [#allocation10], %s740
        // Predicated region
        $region57: #{tpu_custom_call.1} parent=39 // pred_check
          %p742 = pneg %p152
        $region58: #{tpu_custom_call.1} parent=39 // pred_check_branch
          %744 = sbr.rel (%p742) target = $region60
        $region59: #{tpu_custom_call.1} parent=39 // pred_region
          %s745 = smul.u32 2, %s24
          %s747 = ssub.s32 256, 256
          %748 = vsyncadd %s738, %s747
          %s749 = smul.addr %s745, 128
          %s750 = scalar_lea.hbm %s5, %s749
          %s751 = sshll.u32 %s741, 4
          %s752 = int_to_ptr.vmem [resolvable:$true] %s751
          %757 = dma.vmem_to_hbm [thread:$0]  %s752, 256, %s750, %s738, 128, 128, 8
        $region60: #{tpu_custom_call.1} parent=39 // pred_fallthru
          _
      $region40: #{tpu_custom_call.1} parent=5 // pred_fallthru
        _
      %p758 = scmp.le.s32.totalorder 2, %s19
      // Predicated region
      $region61: #{tpu_custom_call.1} parent=5 // pred_check
        %p759 = pneg %p758
      $region62: #{tpu_custom_call.1} parent=5 // pred_check_branch
        %761 = sbr.rel (%p759) target = $region64
      $region63: #{tpu_custom_call.1} parent=5 // pred_region
        %s762 = ssub.s32 %s19, 2
        // Predicated region
        $region65: #{tpu_custom_call.1} parent=63 // pred_check
          %p763 = pneg %p158
        $region66: #{tpu_custom_call.1} parent=63 // pred_check_branch
          %765 = sbr.rel (%p763) target = $region68
        $region67: #{tpu_custom_call.1} parent=63 // pred_region
          %s766 = sand.u32 %s143, 1
          %s767 = scalar_lea.sflag [#allocation4], %s766
          %s768 = sand.u32 %s143, 1
          %s769 = smul.addr %s768, 16
          %s770 = scalar_lea.vmem [#allocation10], %s769
          %771 = dma.done %s767, 256
        $region68: #{tpu_custom_call.1} parent=63 // pred_fallthru
          _
      $region64: #{tpu_custom_call.1} parent=5 // pred_fallthru
        _
    $region6: #{tpu_custom_call.1} parent=1 // loop_footer
      %s23 = sadd.s32 1, %s19
    $region7: #{tpu_custom_call.1} parent=1 // loop_footer_branch
      %18 = sbr.rel target = $region3
    $region8: #{tpu_custom_call.1} parent=1 // loop_exit
      _
    %772 = vsyncpa [#allocation3], 1
    %s773 = scalar_lea.sflag [#allocation3], 1
    %774 = vsyncpa %s773, 1
    %775 = vsyncpa [#allocation6], 1
    %776 = vsyncpa [#allocation9], 1
    %777 = vsyncpa [#allocation4], 1
    %s778 = scalar_lea.sflag [#allocation4], 1
    %779 = vsyncpa %s778, 1

// kernel: tpu_custom_call.1
$region0: #{tpu_custom_call.1}
  #allocation0 [shape = 'u32[]', space=smem, size = 0x4, offset = 0x4, fixed_abs, tag = 'smem constant byte address 0x4 - core index']
  #allocation1 [shape = 'u32[144,128]{1,0:T(1,128)}', space=vmem, size = 0x12000, scoped, tag = 'internal scratch']
  %s0 = inlined_call_operand.hbm [shape: bf16[32,128], index: 0, kind: input, shape index: {}]
  %s1 = inlined_call_operand.hbm [shape: bf16[128,256], index: 1, kind: input, shape index: {}]
  %s2 = inlined_call_operand.hbm [shape: f32[3,256], index: 2, kind: input, shape index: {}]
  %s3 = inlined_call_operand.hbm [shape: bf16[256,128], index: 3, kind: input, shape index: {}]
  %s4 = inlined_call_operand.vmem [shape: f32[1,128], index: 4, kind: input, shape index: {}]
  %s5 = inlined_call_operand.hbm [shape: f32[32,128], index: 5, kind: output, shape index: {}]
  %s6 = sld [smem:[#allocation0]]
  $region69: #{tpu_custom_call.1} parent=0
    _
  %s8 = ssub.s32 1, %s6
  %s9 = scalar_select 0, %s8, %s6
  $region1: #{tpu_custom_call.1} parent=0
    #allocation2 [shape = 'u8[8192]{0}', space=vmem, size = 0x2000, scoped, tag = 'input window, operand 0']
    #allocation3 [shape = 's32[2]{0}', space=sflag, size = 0x8, scoped, tag = 'scoped memory for tpu_custom_call.1']
    #allocation4 [shape = 's32[2]{0}', space=sflag, size = 0x8, scoped, tag = 'scoped memory for tpu_custom_call.1']
    #allocation5 [shape = 'u8[65536]{0}', space=vmem, size = 0x10000, scoped, tag = 'input window, operand 1, single buffered']
    #allocation6 [shape = 's32[1]{0}', space=sflag, size = 0x4, scoped, tag = 'scoped memory for tpu_custom_call.1']
    #allocation7 [shape = 'u8[4096]{0}', space=vmem, size = 0x1000, scoped, tag = 'input window, operand 2, single buffered']
    #allocation8 [shape = 'u8[65536]{0}', space=vmem, size = 0x10000, scoped, tag = 'input window, operand 3, single buffered']
    #allocation9 [shape = 's32[1]{0}', space=sflag, size = 0x4, scoped, tag = 'scoped memory for tpu_custom_call.1']
    #allocation10 [shape = 'u8[16384]{0}', space=vmem, size = 0x4000, scoped, tag = 'output window, operand 0']
    %10 = vsyncpa [#allocation3], 0
    %s11 = scalar_lea.sflag [#allocation3], 1
    %12 = vsyncpa %s11, 0
    %13 = vsyncpa [#allocation6], 0
    %14 = vsyncpa [#allocation9], 0
    %15 = vsyncpa [#allocation4], 0
    %s16 = scalar_lea.sflag [#allocation4], 1
    %17 = vsyncpa %s16, 0
    loop: start=0, step=1, limit=4
    $region2: #{tpu_custom_call.1} parent=1 // loop_pre_header
      _
    $region3: #{tpu_custom_call.1} parent=1 // loop_header
      %s19 = sphi 0, %s23
      %p20 = scmp.ge.s32.totalorder %s19, 4
      %s29 = sphi 0, %s31
      %s32 = sphi 0, %s29
      %s33 = sphi 0, %s32
      %s49 = sphi 0, %s33
      %s53 = sphi 0, %s53
      %s55 = sphi 0, %s53
      %s56 = sphi 0, %s55
      %s70 = sphi 0, %s56
      %s74 = sphi 0, %s74
      %s76 = sphi 0, %s74
      %s77 = sphi 0, %s76
      %s91 = sphi 0, %s77
      %s95 = sphi 0, %s95
      %s97 = sphi 0, %s95
      %s98 = sphi 0, %s97
      %s112 = sphi 0, %s98
      %s116 = sphi 0, %s116
      %s118 = sphi 0, %s116
      %s119 = sphi 0, %s118
      %s133 = sphi 0, %s119
      %s139 = sphi 0, %s141
      %s142 = sphi 0, %s139
      %s143 = sphi 0, %s142
      %s159 = sphi 0, %s143
    $region4: #{tpu_custom_call.1} parent=1 // loop_header_branch
      %22 = sbr.rel (%p20) target = $region8
    $region5: #{tpu_custom_call.1} parent=1 // loop_body
      %s24 = ssub.s32 %s19, 1
      %s25 = ssub.s32 %s19, 2
      %s26 = sadd.s32 %s19, 1
      %s27 = ssub.s32 %s19, %s26
      %p28 = scmp.eq.s32.totalorder %s27, 0
      %s30 = sadd.s32 %s29, 1
      %s31 = scalar_select %p28, %s29, %s30
      %p34 = pneg %p28
      %p35 = scmp.eq.s32.totalorder %s19, 1
      %p36 = por %p34, %p35
      %p37 = scmp.ne.s32.totalorder %s29, %s32
      %p38 = scmp.eq.s32.totalorder %s19, 0
      %p39 = por %p37, %p38
      %p40 = scmp.ne.s32.totalorder %s29, %s32
      %p41 = scmp.eq.s32.totalorder %s24, 1
      %p42 = por %p40, %p41
      %p43 = scmp.ne.s32.totalorder %s32, %s33
      %p44 = scmp.eq.s32.totalorder %s24, 0
      %p45 = por %p43, %p44
      %p46 = scmp.ne.s32.totalorder %s32, %s33
      %p47 = scmp.eq.s32.totalorder %s25, 1
      %p48 = por %p46, %p47
      %p50 = scmp.ne.s32.totalorder %s33, %s49
      %p51 = scmp.eq.s32.totalorder %s25, 0
      %p52 = por %p50, %p51
      %s54 = sadd.s32 %s53, 1
      %p57 = scmp.eq.s32.totalorder %s19, 1
      %p58 = scmp.ne.s32.totalorder %s53, %s55
      %p59 = scmp.eq.s32.totalorder %s19, 0
      %p60 = por %p58, %p59
      %p61 = scmp.ne.s32.totalorder %s53, %s55
      %p62 = scmp.eq.s32.totalorder %s24, 1
      %p63 = por %p61, %p62
      %p64 = scmp.ne.s32.totalorder %s55, %s56
      %p65 = scmp.eq.s32.totalorder %s24, 0
      %p66 = por %p64, %p65
      %p67 = scmp.ne.s32.totalorder %s55, %s56
      %p68 = scmp.eq.s32.totalorder %s25, 1
      %p69 = por %p67, %p68
      %p71 = scmp.ne.s32.totalorder %s56, %s70
      %p72 = scmp.eq.s32.totalorder %s25, 0
      %p73 = por %p71, %p72
      %s75 = sadd.s32 %s74, 1
      %p78 = scmp.eq.s32.totalorder %s19, 1
      %p79 = scmp.ne.s32.totalorder %s74, %s76
      %p80 = scmp.eq.s32.totalorder %s19, 0
      %p81 = por %p79, %p80
      %p82 = scmp.ne.s32.totalorder %s74, %s76
      %p83 = scmp.eq.s32.totalorder %s24, 1
      %p84 = por %p82, %p83
      %p85 = scmp.ne.s32.totalorder %s76, %s77
      %p86 = scmp.eq.s32.totalorder %s24, 0
      %p87 = por %p85, %p86
      %p88 = scmp.ne.s32.totalorder %s76, %s77
      %p89 = scmp.eq.s32.totalorder %s25, 1
      %p90 = por %p88, %p89
      %p92 = scmp.ne.s32.totalorder %s77, %s91
      %p93 = scmp.eq.s32.totalorder %s25, 0
      %p94 = por %p92, %p93
      %s96 = sadd.s32 %s95, 1
      %p99 = scmp.eq.s32.totalorder %s19, 1
      %p100 = scmp.ne.s32.totalorder %s95, %s97
      %p101 = scmp.eq.s32.totalorder %s19, 0
      %p102 = por %p100, %p101
      %p103 = scmp.ne.s32.totalorder %s95, %s97
      %p104 = scmp.eq.s32.totalorder %s24, 1
      %p105 = por %p103, %p104
      %p106 = scmp.ne.s32.totalorder %s97, %s98
      %p107 = scmp.eq.s32.totalorder %s24, 0
      %p108 = por %p106, %p107
      %p109 = scmp.ne.s32.totalorder %s97, %s98
      %p110 = scmp.eq.s32.totalorder %s25, 1
      %p111 = por %p109, %p110
      %p113 = scmp.ne.s32.totalorder %s98, %s112
      %p114 = scmp.eq.s32.totalorder %s25, 0
      %p115 = por %p113, %p114
      %s117 = sadd.s32 %s116, 1
      %p120 = scmp.eq.s32.totalorder %s19, 1
      %p121 = scmp.ne.s32.totalorder %s116, %s118
      %p122 = scmp.eq.s32.totalorder %s19, 0
      %p123 = por %p121, %p122
      %p124 = scmp.ne.s32.totalorder %s116, %s118
      %p125 = scmp.eq.s32.totalorder %s24, 1
      %p126 = por %p124, %p125
      %p127 = scmp.ne.s32.totalorder %s118, %s119
      %p128 = scmp.eq.s32.totalorder %s24, 0
      %p129 = por %p127, %p128
      %p130 = scmp.ne.s32.totalorder %s118, %s119
      %p131 = scmp.eq.s32.totalorder %s25, 1
      %p132 = por %p130, %p131
      %p134 = scmp.ne.s32.totalorder %s119, %s133
      %p135 = scmp.eq.s32.totalorder %s25, 0
      %p136 = por %p134, %p135
      %s137 = ssub.s32 %s19, %s26
      %p138 = scmp.eq.s32.totalorder %s137, 0
      %s140 = sadd.s32 %s139, 1
      %s141 = scalar_select %p138, %s139, %s140
      %p144 = pneg %p138
      %p145 = scmp.eq.s32.totalorder %s19, 1
      %p146 = por %p144, %p145
      %p147 = scmp.ne.s32.totalorder %s139, %s142
      %p148 = scmp.eq.s32.totalorder %s19, 0
      %p149 = por %p147, %p148
      %p150 = scmp.ne.s32.totalorder %s139, %s142
      %p151 = scmp.eq.s32.totalorder %s24, 1
      %p152 = por %p150, %p151
      %p153 = scmp.ne.s32.totalorder %s142, %s143
      %p154 = scmp.eq.s32.totalorder %s24, 0
      %p155 = por %p153, %p154
      %p156 = scmp.ne.s32.totalorder %s142, %s143
      %p157 = scmp.eq.s32.totalorder %s25, 1
      %p158 = por %p156, %p157
      %p160 = scmp.ne.s32.totalorder %s143, %s159
      %p161 = scmp.eq.s32.totalorder %s25, 0
      %p162 = por %p160, %p161
      %p163 = scmp.le.s32.totalorder 1, %s19
      %p164 = scmp.lt.s32.totalorder %s19, 3
      %p165 = pnand %p163, %p164
      %p166 = pneg %p165
      // Predicated region
      $region9: #{tpu_custom_call.1} parent=5 // pred_check
        _
      $region10: #{tpu_custom_call.1} parent=5 // pred_check_branch
        %168 = sbr.rel (%p165) target = $region12
      $region11: #{tpu_custom_call.1} parent=5 // pred_region
        %s169 = ssub.s32 %s19, 1
        // Predicated region
        $region13: #{tpu_custom_call.1} parent=11 // pred_check
          %p170 = pneg %p66
        $region14: #{tpu_custom_call.1} parent=11 // pred_check_branch
          %172 = sbr.rel (%p170) target = $region16
        $region15: #{tpu_custom_call.1} parent=11 // pred_region
          %s174 = ssub.s32 2048, 2048
          %175 = vsyncadd [#allocation6], %s174
          %s176 = sshll.u32 [#allocation5], 4
          %s177 = int_to_ptr.vmem [resolvable:$true] %s176
          %182 = dma.hbm_to_vmem [thread:$0]  %s1, 2048, %s177, [#allocation6], 128, 128, 8
        $region16: #{tpu_custom_call.1} parent=11 // pred_fallthru
          _
        // Predicated region
        $region17: #{tpu_custom_call.1} parent=11 // pred_check
          %p183 = pneg %p87
        $region18: #{tpu_custom_call.1} parent=11 // pred_check_branch
          %185 = sbr.rel (%p183) target = $region20
        $region19: #{tpu_custom_call.1} parent=11 // pred_region
          %s187 = ssub.s32 128, 128
          %188 = vsyncadd [#allocation6], %s187
          %s190 = sshll.u32 [#allocation7], 4
          %s191 = int_to_ptr.vmem [resolvable:$true] %s190
          %193 = dma.hbm_to_vmem [thread:$0]  %s2, 128, %s191, [#allocation6]
        $region20: #{tpu_custom_call.1} parent=11 // pred_fallthru
          _
        // Predicated region
        $region21: #{tpu_custom_call.1} parent=11 // pred_check
          %p194 = pneg %p108
        $region22: #{tpu_custom_call.1} parent=11 // pred_check_branch
          %196 = sbr.rel (%p194) target = $region24
        $region23: #{tpu_custom_call.1} parent=11 // pred_region
          %s198 = ssub.s32 2048, 2048
          %199 = vsyncadd [#allocation9], %s198
          %s200 = sshll.u32 [#allocation8], 4
          %s201 = int_to_ptr.vmem [resolvable:$true] %s200
          %206 = dma.hbm_to_vmem [thread:$0]  %s3, 2048, %s201, [#allocation9], 64, 64, 4
        $region24: #{tpu_custom_call.1} parent=11 // pred_fallthru
          _
        // Predicated region
        $region25: #{tpu_custom_call.1} parent=11 // pred_check
          %p207 = pneg %p129
        $region26: #{tpu_custom_call.1} parent=11 // pred_check_branch
          %209 = sbr.rel (%p207) target = $region28
        $region27: #{tpu_custom_call.1} parent=11 // pred_region
          _
        $region28: #{tpu_custom_call.1} parent=11 // pred_fallthru
          _
      $region12: #{tpu_custom_call.1} parent=5 // pred_fallthru
        _
      %p210 = scmp.lt.s32.totalorder %s19, 2
      // Predicated region
      $region29: #{tpu_custom_call.1} parent=5 // pred_check
        %p211 = pneg %p210
      $region30: #{tpu_custom_call.1} parent=5 // pred_check_branch
        %213 = sbr.rel (%p211) target = $region32
      $region31: #{tpu_custom_call.1} parent=5 // pred_region
        // Predicated region
        $region33: #{tpu_custom_call.1} parent=31 // pred_check
          %p214 = pneg %p39
        $region34: #{tpu_custom_call.1} parent=31 // pred_check_branch
          %216 = sbr.rel (%p214) target = $region36
        $region35: #{tpu_custom_call.1} parent=31 // pred_region
          %s217 = sand.u32 %s29, 1
          %s218 = scalar_lea.sflag [#allocation3], %s217
          %s219 = sand.u32 %s29, 1
          %s220 = smul.addr %s219, 8
          %s221 = scalar_lea.vmem [#allocation2], %s220
          %s222 = smul.u32 2, %s19
          %s224 = ssub.s32 128, 128
          %225 = vsyncadd %s218, %s224
          %s226 = smul.addr %s222, 64
          %s227 = scalar_lea.hbm %s0, %s226
          %s228 = sshll.u32 %s221, 4
          %s229 = int_to_ptr.vmem [resolvable:$true] %s228
          %234 = dma.hbm_to_vmem [thread:$0]  %s227, 128, %s229, %s218, 64, 64, 4
        $region36: #{tpu_custom_call.1} parent=31 // pred_fallthru
          _
      $region32: #{tpu_custom_call.1} parent=5 // pred_fallthru
        _
      %p235 = scmp.le.s32.totalorder 1, %s19
      %p236 = scmp.lt.s32.totalorder %s19, 3
      %p237 = pnand %p235, %p236
      %p238 = pneg %p237
      // Predicated region
      $region37: #{tpu_custom_call.1} parent=5 // pred_check
        _
      $region38: #{tpu_custom_call.1} parent=5 // pred_check_branch
        %240 = sbr.rel (%p237) target = $region40
      $region39: #{tpu_custom_call.1} parent=5 // pred_region
        %s241 = ssub.s32 %s19, 1
        %s242 = sand.u32 %s32, 1
        %s243 = scalar_lea.sflag [#allocation3], %s242
        %s244 = sand.u32 %s32, 1
        %s245 = smul.addr %s244, 8
        %s246 = scalar_lea.vmem [#allocation2], %s245
        // Predicated region
        $region41: #{tpu_custom_call.1} parent=39 // pred_check
          %p247 = pneg %p45
        $region42: #{tpu_custom_call.1} parent=39 // pred_check_branch
          %249 = sbr.rel (%p247) target = $region44
        $region43: #{tpu_custom_call.1} parent=39 // pred_region
          %250 = dma.done %s243, 128
        $region44: #{tpu_custom_call.1} parent=39 // pred_fallthru
          _
        // Predicated region
        $region45: #{tpu_custom_call.1} parent=39 // pred_check
          %p251 = pneg %p66
        $region46: #{tpu_custom_call.1} parent=39 // pred_check_branch
          %253 = sbr.rel (%p251) target = $region48
        $region47: #{tpu_custom_call.1} parent=39 // pred_region
          %254 = dma.done [#allocation6], 2048
        $region48: #{tpu_custom_call.1} parent=39 // pred_fallthru
          _
        // Predicated region
        $region49: #{tpu_custom_call.1} parent=39 // pred_check
          %p255 = pneg %p87
        $region50: #{tpu_custom_call.1} parent=39 // pred_check_branch
          %257 = sbr.rel (%p255) target = $region52
        $region51: #{tpu_custom_call.1} parent=39 // pred_region
          %258 = dma.done [#allocation6], 128
        $region52: #{tpu_custom_call.1} parent=39 // pred_fallthru
          _
        // Predicated region
        $region53: #{tpu_custom_call.1} parent=39 // pred_check
          %p259 = pneg %p108
        $region54: #{tpu_custom_call.1} parent=39 // pred_check_branch
          %261 = sbr.rel (%p259) target = $region56
        $region55: #{tpu_custom_call.1} parent=39 // pred_region
          %262 = dma.done [#allocation9], 2048
        $region56: #{tpu_custom_call.1} parent=39 // pred_fallthru
          _
        %s263 = sand.u32 %s32, 1
        %s264 = scalar_lea.sflag [#allocation3], %s263
        %s265 = sand.u32 %s32, 1
        %s266 = smul.addr %s265, 8
        %s267 = scalar_lea.vmem [#allocation2], %s266
        %p268 = pneg %p45
        %p269 = pneg %p42
        %p270 = pneg %p66
        %p271 = pneg %p63
        %p272 = pneg %p87
        %p273 = pneg %p84
        %p274 = pneg %p108
        %p275 = pneg %p105
        %p276 = pneg %p129
        %p277 = pneg %p126
        %p278 = pneg %p155
        %p279 = pneg %p152
        %s280 = sand.u32 %s142, 1
        %s281 = scalar_lea.sflag [#allocation4], %s280
        %s282 = sand.u32 %s142, 1
        %s283 = smul.addr %s282, 16
        %s284 = scalar_lea.vmem [#allocation10], %s283
        %s285 = smul.u32 2, %s24
        %s286 = smul.u32 2, %s24
        %v288 = vld [vmem:[#allocation7] sm:$0x77]
        %v289 = vld [vmem:[%s246] sm:$0xf]
        %v290 = vld [vmem:[%s246 + $0x4] sm:$0xf]
        %v291 = vld [vmem:[#allocation5] sm:$0xff]
        %v292 = vld [vmem:[#allocation5 + $0x8] sm:$0xff]
        %v293 = vld [vmem:[#allocation5 + $0x10] sm:$0xff]
        %v294 = vld [vmem:[#allocation5 + $0x18] sm:$0xff]
        %v295 = vld [vmem:[#allocation5 + $0x20] sm:$0xff]
        %v296 = vld [vmem:[#allocation5 + $0x28] sm:$0xff]
        %v297 = vld [vmem:[#allocation5 + $0x30] sm:$0xff]
        %v298 = vld [vmem:[#allocation5 + $0x38] sm:$0xff]
        %v299 = vld [vmem:[#allocation5 + $0x40] sm:$0xff]
        %v300 = vld [vmem:[#allocation5 + $0x48] sm:$0xff]
        %v301 = vld [vmem:[#allocation5 + $0x50] sm:$0xff]
        %v302 = vld [vmem:[#allocation5 + $0x58] sm:$0xff]
        %v303 = vld [vmem:[#allocation5 + $0x60] sm:$0xff]
        %v304 = vld [vmem:[#allocation5 + $0x68] sm:$0xff]
        %v305 = vld [vmem:[#allocation5 + $0x70] sm:$0xff]
        %v306 = vld [vmem:[#allocation5 + $0x78] sm:$0xff]
        %v308 = vlaneseq
        %v309 = vshrl.u32 %v308, 7
        %v310 = vsub.s32 0, %v309
        %v311 = vrot.slane %v288, %v310
        %v312 = vlaneseq
        %v313 = vshrl.u32 %v312, 7
        %v314 = vsub.s32 4, %v313
        %v315 = vrot.slane %v288, %v314
        %v318 = vlaneseq
        %v319 = vshrl.u32 %v318, 7
        %v320 = vsub.s32 0, %v319
        %v321 = vrot.slane %v311, %v320
        %v322 = vlaneseq
        %v323 = vshrl.u32 %v322, 7
        %v324 = vsub.s32 0, %v323
        %v325 = vrot.slane %v315, %v324
        %v328 = vunpack.c.l.b16 %v289
        %v329 = vunpack.c.l.b16 %v290
        %v330 = vpack.c.b16 %v329, %v328
        %v348 = vunpack.c.l.b16 %v291
        %v349 = vunpack.c.h.b16 %v291
        %v350 = vunpack.c.l.b16 %v292
        %v351 = vunpack.c.h.b16 %v292
        %v352 = vunpack.c.l.b16 %v293
        %v353 = vunpack.c.h.b16 %v293
        %v354 = vunpack.c.l.b16 %v294
        %v355 = vunpack.c.h.b16 %v294
        %v356 = vunpack.c.l.b16 %v295
        %v357 = vunpack.c.h.b16 %v295
        %v358 = vunpack.c.l.b16 %v296
        %v359 = vunpack.c.h.b16 %v296
        %v360 = vunpack.c.l.b16 %v297
        %v361 = vunpack.c.h.b16 %v297
        %v362 = vunpack.c.l.b16 %v298
        %v363 = vunpack.c.h.b16 %v298
        %v364 = vunpack.c.l.b16 %v299
        %v365 = vunpack.c.h.b16 %v299
        %v366 = vunpack.c.l.b16 %v300
        %v367 = vunpack.c.h.b16 %v300
        %v368 = vunpack.c.l.b16 %v301
        %v369 = vunpack.c.h.b16 %v301
        %v370 = vunpack.c.l.b16 %v302
        %v371 = vunpack.c.h.b16 %v302
        %v372 = vunpack.c.l.b16 %v303
        %v373 = vunpack.c.h.b16 %v303
        %v374 = vunpack.c.l.b16 %v304
        %v375 = vunpack.c.h.b16 %v304
        %v376 = vunpack.c.l.b16 %v305
        %v377 = vunpack.c.h.b16 %v305
        %v378 = vunpack.c.l.b16 %v306
        %v379 = vunpack.c.h.b16 %v306
        %v380 = vpack.c.b16 %v350, %v348
        %v381 = vpack.c.b16 %v351, %v349
        %v382 = vpack.c.b16 %v354, %v352
        %v383 = vpack.c.b16 %v355, %v353
        %v384 = vpack.c.b16 %v358, %v356
        %v385 = vpack.c.b16 %v359, %v357
        %v386 = vpack.c.b16 %v362, %v360
        %v387 = vpack.c.b16 %v363, %v361
        %v388 = vpack.c.b16 %v366, %v364
        %v389 = vpack.c.b16 %v367, %v365
        %v390 = vpack.c.b16 %v370, %v368
        %v391 = vpack.c.b16 %v371, %v369
        %v392 = vpack.c.b16 %v374, %v372
        %v393 = vpack.c.b16 %v375, %v373
        %v394 = vpack.c.b16 %v378, %v376
        %v395 = vpack.c.b16 %v379, %v377
        %412 = vmatprep.subr.bf16.mxu0 %v381
        %413 = vmatpush1.bf16.msra.mxu0 %v380
        %414 = vmatprep.subr.bf16.mxu0 %v383
        %415 = vmatpush1.bf16.msra.mxu0 %v382
        %416 = vmatprep.subr.bf16.mxu0 %v385
        %417 = vmatpush1.bf16.msra.mxu0 %v384
        %418 = vmatprep.subr.bf16.mxu0 %v387
        %419 = vmatpush1.bf16.msra.mxu0 %v386
        %420 = vmatprep.subr.bf16.mxu0 %v389
        %421 = vmatpush1.bf16.msra.mxu0 %v388
        %422 = vmatprep.subr.bf16.mxu0 %v391
        %423 = vmatpush1.bf16.msra.mxu0 %v390
        %424 = vmatprep.subr.bf16.mxu0 %v393
        %425 = vmatpush1.bf16.msra.mxu0 %v392
        %426 = vmatprep.subr.bf16.mxu0 %v395
        %427 = vmatpush1.bf16.msra.mxu0 %v394
        %428 = vmatprep.subr.bf16.mxu0 0
        %429 = vmatpush1.bf16.msra.mxu0 0
        %430 = vmatprep.subr.bf16.mxu0 0
        %431 = vmatpush1.bf16.msra.mxu0 0
        %432 = vmatprep.subr.bf16.mxu0 0
        %433 = vmatpush1.bf16.msra.mxu0 0
        %434 = vmatprep.subr.bf16.mxu0 0
        %435 = vmatpush1.bf16.msra.mxu0 0
        %436 = vmatprep.subr.bf16.mxu0 0
        %437 = vmatpush1.bf16.msra.mxu0 0
        %438 = vmatprep.subr.bf16.mxu0 0
        %439 = vmatpush1.bf16.msra.mxu0 0
        %440 = vmatprep.subr.bf16.mxu0 0
        %441 = vmatpush1.bf16.msra.mxu0 0
        %442 = vmatprep.subr.bf16.mxu0 0
        %443 = vmatpush1.bf16.msra.mxu0 0
        %444 = vmatprep.mubr.bf16.mxu0 0
        %445 = vmatmul.mubr.bf16.gmra.mrb[0].mxu0 %v330
        %v446 = vpop.f32.mrb[0].mxu0
        %v447 = vadd.f32 %v321, %v446
        %v448 = vpop.f32.mrb[0].mxu0
        %v449 = vadd.f32 %v325, %v448
        %v450 = vpop.f32.mrb[0].mxu0
        %v451 = vadd.f32 %v321, %v450
        %v452 = vpop.f32.mrb[0].mxu0
        %v453 = vadd.f32 %v325, %v452
        %454 = vdwg.mxu0
        %v455 = vmul.f32 %v447, 0.5
        %v456 = vmul.f32 %v449, 0.5
        %v457 = vmul.f32 %v451, 0.5
        %v458 = vmul.f32 %v453, 0.5
        %v459 = vmul.f32 %v447, 0.70710677
        %v460 = vmul.f32 %v449, 0.70710677
        %v461 = vmul.f32 %v451, 0.70710677
        %v462 = vmul.f32 %v453, 0.70710677
        %v463 = verf.f32.pop %v459
        %v464 = verf.f32.pop %v460
        %v465 = verf.f32.pop %v461
        %v466 = verf.f32.pop %v462
        %v467 = vadd.f32 %v463, 1.0
        %v468 = vadd.f32 %v464, 1.0
        %v469 = vadd.f32 %v465, 1.0
        %v470 = vadd.f32 %v466, 1.0
        %v471 = vmul.f32 %v455, %v467
        %v472 = vmul.f32 %v456, %v468
        %v473 = vmul.f32 %v457, %v469
        %v474 = vmul.f32 %v458, %v470
        %v475 = vadd.f32 %v471, %v472
        %476 = vadd.xlane.f32.xlu0 %v475
        %v477 = vpop.xlane.xlu0 %476
        %v478 = vadd.f32 %v473, %v474
        %479 = vadd.xlane.f32.xlu0 %v478
        %v480 = vpop.xlane.xlu0 %479
        %v481 = vmul.f32 %v477, 0.00390625
        %v482 = vmul.f32 %v480, 0.00390625
        %v483 = vmul.f32 %v471, %v471
        %v484 = vmul.f32 %v472, %v472
        %v485 = vmul.f32 %v473, %v473
        %v486 = vmul.f32 %v474, %v474
        %v487 = vadd.f32 %v483, %v484
        %488 = vadd.xlane.f32.xlu0 %v487
        %v489 = vpop.xlane.xlu0 %488
        %v490 = vadd.f32 %v485, %v486
        %491 = vadd.xlane.f32.xlu0 %v490
        %v492 = vpop.xlane.xlu0 %491
        %v493 = vmul.f32 %v489, 0.00390625
        %v494 = vmul.f32 %v492, 0.00390625
        %v495 = vmul.f32 %v481, %v481
        %v496 = vmul.f32 %v482, %v482
        %v497 = vsub.f32 %v493, %v495
        %v498 = vsub.f32 %v494, %v496
        %v499 = vmax.f32 %v497, 0.0
        %v500 = vmax.f32 %v498, 0.0
        %v501 = vadd.f32 %v499, 1e-06
        %v502 = vadd.f32 %v500, 1e-06
        %v503 = vrsqrt.pop %v501
        %v504 = vrsqrt.pop %v502
        %v505 = vsub.f32 %v471, %v481
        %v506 = vsub.f32 %v472, %v481
        %v507 = vsub.f32 %v473, %v482
        %v508 = vsub.f32 %v474, %v482
        %v509 = vlaneseq
        %v510 = vshrl.u32 %v509, 7
        %v511 = vsub.s32 1, %v510
        %v512 = vrot.slane %v288, %v511
        %v513 = vlaneseq
        %v514 = vshrl.u32 %v513, 7
        %v515 = vsub.s32 5, %v514
        %v516 = vrot.slane %v288, %v515
        %v519 = vlaneseq
        %v520 = vshrl.u32 %v519, 7
        %v521 = vsub.s32 1, %v520
        %v522 = vrot.slane %v512, %v521
        %v523 = vlaneseq
        %v524 = vshrl.u32 %v523, 7
        %v525 = vsub.s32 1, %v524
        %v526 = vrot.slane %v516, %v525
        %v527 = vmul.f32 %v503, %v522
        %v528 = vmul.f32 %v503, %v526
        %v529 = vmul.f32 %v504, %v522
        %v530 = vmul.f32 %v504, %v526
        %v531 = vmul.f32 %v505, %v527
        %v532 = vmul.f32 %v506, %v528
        %v533 = vmul.f32 %v507, %v529
        %v534 = vmul.f32 %v508, %v530
        %v535 = vlaneseq
        %v536 = vshrl.u32 %v535, 7
        %v537 = vsub.s32 2, %v536
        %v538 = vrot.slane %v288, %v537
        %v539 = vlaneseq
        %v540 = vshrl.u32 %v539, 7
        %v541 = vsub.s32 6, %v540
        %v542 = vrot.slane %v288, %v541
        %v545 = vlaneseq
        %v546 = vshrl.u32 %v545, 7
        %v547 = vsub.s32 2, %v546
        %v548 = vrot.slane %v538, %v547
        %v549 = vlaneseq
        %v550 = vshrl.u32 %v549, 7
        %v551 = vsub.s32 2, %v550
        %v552 = vrot.slane %v542, %v551
        %v553 = vadd.f32 %v531, %v548
        %v554 = vadd.f32 %v532, %v552
        %v555 = vadd.f32 %v533, %v548
        %v556 = vadd.f32 %v534, %v552
        %v557 = vpack.c.bf16 %v555, %v553
        %v558 = vpack.c.bf16 %v556, %v554
        %v559 = vld [vmem:[#allocation8] sm:$0xf]
        %v560 = vld [vmem:[#allocation8 + $0x4] sm:$0xf]
        %v561 = vld [vmem:[#allocation8 + $0x8] sm:$0xf]
        %v562 = vld [vmem:[#allocation8 + $0xc] sm:$0xf]
        %v563 = vld [vmem:[#allocation8 + $0x10] sm:$0xf]
        %v564 = vld [vmem:[#allocation8 + $0x14] sm:$0xf]
        %v565 = vld [vmem:[#allocation8 + $0x18] sm:$0xf]
        %v566 = vld [vmem:[#allocation8 + $0x1c] sm:$0xf]
        %v567 = vld [vmem:[#allocation8 + $0x20] sm:$0xf]
        %v568 = vld [vmem:[#allocation8 + $0x24] sm:$0xf]
        %v569 = vld [vmem:[#allocation8 + $0x28] sm:$0xf]
        %v570 = vld [vmem:[#allocation8 + $0x2c] sm:$0xf]
        %v571 = vld [vmem:[#allocation8 + $0x30] sm:$0xf]
        %v572 = vld [vmem:[#allocation8 + $0x34] sm:$0xf]
        %v573 = vld [vmem:[#allocation8 + $0x38] sm:$0xf]
        %v574 = vld [vmem:[#allocation8 + $0x3c] sm:$0xf]
        %v575 = vld [vmem:[#allocation8 + $0x40] sm:$0xf]
        %v576 = vld [vmem:[#allocation8 + $0x44] sm:$0xf]
        %v577 = vld [vmem:[#allocation8 + $0x48] sm:$0xf]
        %v578 = vld [vmem:[#allocation8 + $0x4c] sm:$0xf]
        %v579 = vld [vmem:[#allocation8 + $0x50] sm:$0xf]
        %v580 = vld [vmem:[#allocation8 + $0x54] sm:$0xf]
        %v581 = vld [vmem:[#allocation8 + $0x58] sm:$0xf]
        %v582 = vld [vmem:[#allocation8 + $0x5c] sm:$0xf]
        %v583 = vld [vmem:[#allocation8 + $0x60] sm:$0xf]
        %v584 = vld [vmem:[#allocation8 + $0x64] sm:$0xf]
        %v585 = vld [vmem:[#allocation8 + $0x68] sm:$0xf]
        %v586 = vld [vmem:[#allocation8 + $0x6c] sm:$0xf]
        %v587 = vld [vmem:[#allocation8 + $0x70] sm:$0xf]
        %v588 = vld [vmem:[#allocation8 + $0x74] sm:$0xf]
        %v589 = vld [vmem:[#allocation8 + $0x78] sm:$0xf]
        %v590 = vld [vmem:[#allocation8 + $0x7c] sm:$0xf]
        %v591 = vld [vmem:[%s4] sm:$0x1]
        %v593 = vlaneseq
        %v594 = vshrl.u32 %v593, 7
        %v595 = vsub.s32 0, %v594
        %v596 = vrot.slane %v591, %v595
        %v630 = vunpack.c.l.b16 %v559
        %v631 = vunpack.c.l.b16 %v560
        %v632 = vunpack.c.l.b16 %v561
        %v633 = vunpack.c.l.b16 %v562
        %v634 = vunpack.c.l.b16 %v563
        %v635 = vunpack.c.l.b16 %v564
        %v636 = vunpack.c.l.b16 %v565
        %v637 = vunpack.c.l.b16 %v566
        %v638 = vunpack.c.l.b16 %v567
        %v639 = vunpack.c.l.b16 %v568
        %v640 = vunpack.c.l.b16 %v569
        %v641 = vunpack.c.l.b16 %v570
        %v642 = vunpack.c.l.b16 %v571
        %v643 = vunpack.c.l.b16 %v572
        %v644 = vunpack.c.l.b16 %v573
        %v645 = vunpack.c.l.b16 %v574
        %v646 = vunpack.c.l.b16 %v575
        %v647 = vunpack.c.l.b16 %v576
        %v648 = vunpack.c.l.b16 %v577
        %v649 = vunpack.c.l.b16 %v578
        %v650 = vunpack.c.l.b16 %v579
        %v651 = vunpack.c.l.b16 %v580
        %v652 = vunpack.c.l.b16 %v581
        %v653 = vunpack.c.l.b16 %v582
        %v654 = vunpack.c.l.b16 %v583
        %v655 = vunpack.c.l.b16 %v584
        %v656 = vunpack.c.l.b16 %v585
        %v657 = vunpack.c.l.b16 %v586
        %v658 = vunpack.c.l.b16 %v587
        %v659 = vunpack.c.l.b16 %v588
        %v660 = vunpack.c.l.b16 %v589
        %v661 = vunpack.c.l.b16 %v590
        %v662 = vpack.c.b16 %v631, %v630
        %v663 = vpack.c.b16 %v633, %v632
        %v664 = vpack.c.b16 %v635, %v634
        %v665 = vpack.c.b16 %v637, %v636
        %v666 = vpack.c.b16 %v639, %v638
        %v667 = vpack.c.b16 %v641, %v640
        %v668 = vpack.c.b16 %v643, %v642
        %v669 = vpack.c.b16 %v645, %v644
        %v670 = vpack.c.b16 %v647, %v646
        %v671 = vpack.c.b16 %v649, %v648
        %v672 = vpack.c.b16 %v651, %v650
        %v673 = vpack.c.b16 %v653, %v652
        %v674 = vpack.c.b16 %v655, %v654
        %v675 = vpack.c.b16 %v657, %v656
        %v676 = vpack.c.b16 %v659, %v658
        %v677 = vpack.c.b16 %v661, %v660
        %694 = vmatprep.subr.bf16.mxu0 0
        %695 = vmatpush1.bf16.msra.mxu0 %v662
        %696 = vmatprep.subr.bf16.mxu0 0
        %697 = vmatpush1.bf16.msra.mxu0 %v663
        %698 = vmatprep.subr.bf16.mxu0 0
        %699 = vmatpush1.bf16.msra.mxu0 %v664
        %700 = vmatprep.subr.bf16.mxu0 0
        %701 = vmatpush1.bf16.msra.mxu0 %v665
        %702 = vmatprep.subr.bf16.mxu0 0
        %703 = vmatpush1.bf16.msra.mxu0 %v666
        %704 = vmatprep.subr.bf16.mxu0 0
        %705 = vmatpush1.bf16.msra.mxu0 %v667
        %706 = vmatprep.subr.bf16.mxu0 0
        %707 = vmatpush1.bf16.msra.mxu0 %v668
        %708 = vmatprep.subr.bf16.mxu0 0
        %709 = vmatpush1.bf16.msra.mxu0 %v669
        %710 = vmatprep.subr.bf16.mxu0 0
        %711 = vmatpush1.bf16.msra.mxu0 %v670
        %712 = vmatprep.subr.bf16.mxu0 0
        %713 = vmatpush1.bf16.msra.mxu0 %v671
        %714 = vmatprep.subr.bf16.mxu0 0
        %715 = vmatpush1.bf16.msra.mxu0 %v672
        %716 = vmatprep.subr.bf16.mxu0 0
        %717 = vmatpush1.bf16.msra.mxu0 %v673
        %718 = vmatprep.subr.bf16.mxu0 0
        %719 = vmatpush1.bf16.msra.mxu0 %v674
        %720 = vmatprep.subr.bf16.mxu0 0
        %721 = vmatpush1.bf16.msra.mxu0 %v675
        %722 = vmatprep.subr.bf16.mxu0 0
        %723 = vmatpush1.bf16.msra.mxu0 %v676
        %724 = vmatprep.subr.bf16.mxu0 0
        %725 = vmatpush1.bf16.msra.mxu0 %v677
        %726 = vmatprep.mubr.bf16.mxu0 %v558
        %727 = vmatmul.mubr.bf16.gmra.mrb[0].mxu0 %v557
        %v728 = vpop.f32.mrb[0].mxu0
        %v729 = vadd.f32 %v596, %v728
        %v730 = vpop.f32.mrb[0].mxu0
        %v731 = vpop.f32.mrb[0].mxu0
        %v732 = vadd.f32 %v596, %v731
        %v733 = vpop.f32.mrb[0].mxu0
        %734 = vdwg.mxu0
        %735 = vst [vmem:[%s284] sm:$0xff] %v729
        %736 = vst [vmem:[%s284 + $0x8] sm:$0xff] %v732
        %s737 = sand.u32 %s142, 1
        %s738 = scalar_lea.sflag [#allocation4], %s737
        %s739 = sand.u32 %s142, 1
        %s740 = smul.addr %s739, 16
        %s741 = scalar_lea.vmem [#allocation10], %s740
        // Predicated region
        $region57: #{tpu_custom_call.1} parent=39 // pred_check
          %p742 = pneg %p152
        $region58: #{tpu_custom_call.1} parent=39 // pred_check_branch
          %744 = sbr.rel (%p742) target = $region60
        $region59: #{tpu_custom_call.1} parent=39 // pred_region
          %s745 = smul.u32 2, %s24
          %s747 = ssub.s32 256, 256
          %748 = vsyncadd %s738, %s747
          %s749 = smul.addr %s745, 128
          %s750 = scalar_lea.hbm %s5, %s749
          %s751 = sshll.u32 %s741, 4
          %s752 = int_to_ptr.vmem [resolvable:$true] %s751
          %757 = dma.vmem_to_hbm [thread:$0]  %s752, 256, %s750, %s738, 128, 128, 8
        $region60: #{tpu_custom_call.1} parent=39 // pred_fallthru
          _
      $region40: #{tpu_custom_call.1} parent=5 // pred_fallthru
        _
      %p758 = scmp.le.s32.totalorder 2, %s19
      // Predicated region
      $region61: #{tpu_custom_call.1} parent=5 // pred_check
        %p759 = pneg %p758
      $region62: #{tpu_custom_call.1} parent=5 // pred_check_branch
        %761 = sbr.rel (%p759) target = $region64
      $region63: #{tpu_custom_call.1} parent=5 // pred_region
        %s762 = ssub.s32 %s19, 2
        // Predicated region
        $region65: #{tpu_custom_call.1} parent=63 // pred_check
          %p763 = pneg %p158
        $region66: #{tpu_custom_call.1} parent=63 // pred_check_branch
          %765 = sbr.rel (%p763) target = $region68
        $region67: #{tpu_custom_call.1} parent=63 // pred_region
          %s766 = sand.u32 %s143, 1
          %s767 = scalar_lea.sflag [#allocation4], %s766
          %s768 = sand.u32 %s143, 1
          %s769 = smul.addr %s768, 16
          %s770 = scalar_lea.vmem [#allocation10], %s769
          %771 = dma.done %s767, 256
        $region68: #{tpu_custom_call.1} parent=63 // pred_fallthru
          _
      $region64: #{tpu_custom_call.1} parent=5 // pred_fallthru
        _
    $region6: #{tpu_custom_call.1} parent=1 // loop_footer
      %s23 = sadd.s32 1, %s19
    $region7: #{tpu_custom_call.1} parent=1 // loop_footer_branch
      %18 = sbr.rel target = $region3
    $region8: #{tpu_custom_call.1} parent=1 // loop_exit
      _
    %772 = vsyncpa [#allocation3], 1
    %s773 = scalar_lea.sflag [#allocation3], 1
    %774 = vsyncpa %s773, 1
    %775 = vsyncpa [#allocation6], 1
    %776 = vsyncpa [#allocation9], 1
    %777 = vsyncpa [#allocation4], 1
    %s778 = scalar_lea.sflag [#allocation4], 1
    %779 = vsyncpa %s778, 1

</llo_original>
